<compile_context>
chip_gen: v5e
topology: v5e:2x2
jax: 0.10.0
libtpu: 0.0.40
codegen_flags: <defaults>
</compile_context>

<pallas_src>
import jax
import jax.numpy as jnp
from jax.experimental import pallas as pl
from jax.experimental.pallas import tpu as pltpu

_NEG_BIG = -1e30  # pads vocab-bias columns; exp() underflows to exactly 0.0


def _vocab_proj_kernel(x_ref, wc_ref, bc_ref, wvt_ref, itemp_ref,
                       o_ref, m_ref, l_ref, acc_ref):
    """Grid = (row_blocks [parallel], vocab_blocks [arbitrary, last])."""
    j = pl.program_id(1)

    @pl.when(j == 0)
    def _():
        m_ref[...] = jnp.full_like(m_ref, -jnp.inf)
        l_ref[...] = jnp.zeros_like(l_ref)
        acc_ref[...] = jnp.zeros_like(acc_ref)

    # Fused (FFN + vocab projection + temperature):
    #   logits = ((x @ wf.T + bf) @ W_sum) / temp == (x @ Wc + bc) * (1/temp_row)
    logits = jnp.dot(x_ref[...], wc_ref[...],
                     preferred_element_type=jnp.float32)            # (TM, TV) f32
    logits = (logits + bc_ref[...]) * itemp_ref[...]

    # Online (streaming) softmax over the vocab grid axis; stats kept in f32.
    m_prev = m_ref[...]
    m_new = jnp.maximum(m_prev, jnp.max(logits, axis=-1, keepdims=True))
    alpha = jnp.exp(m_prev - m_new)
    p = jnp.exp(logits - m_new)                                      # (TM, TV) f32
    l_ref[...] = alpha * l_ref[...] + jnp.sum(p, axis=-1, keepdims=True)
    acc_ref[...] = alpha * acc_ref[...] + jnp.dot(
        p.astype(wvt_ref.dtype), wvt_ref[...],
        preferred_element_type=jnp.float32)                          # (TM, H)
    m_ref[...] = m_new

    # Deferred normalization: divide only the H-wide accumulator, not (TM, V).
    @pl.when(j == pl.num_programs(1) - 1)
    def _():
        inv_l = pl.reciprocal(l_ref[...], approx=True)               # EUP slot
        o_ref[...] = (acc_ref[...] * inv_l).astype(o_ref.dtype)


def vocab_projection_ffn(x, vocab_emb, wf, bf, temps, *,
                         tm=256, tv=2048,
                         matmul_dtype=jnp.bfloat16,
                         vmem_limit_bytes=48 * 1024 * 1024):
    """Pallas forward pass.  Returns (output, reconstruction_loss).

    x:         (B, T, C) float32
    vocab_emb: (V, C)    float32   (vocab_embeddings_ref.weight)
    wf:        (D, D)    float32   (channel_ffns.weight; y = x @ wf.T + bf)
    bf:        (D,)      float32
    temps:     (H,)      float32   (channel_temperatures)
    """
    B, T, C = x.shape
    H = int(temps.shape[0])
    D = C // H
    assert D * H == C and H == D, "reference einsum requires n_head == head_dim"
    V = int(vocab_emb.shape[0])
    M = B * T * H

    assert tm % 8 == 0 and tm % H == 0, "tm must be a multiple of 8 and of n_head"
    assert tv % 128 == 0, "tv must be a multiple of 128 (lane width)"

    f32 = jnp.float32

    # ---- one-time wrapper-side folding (review item 1/3/4) -------------------
    # vocab_channels[h, v, d] = E[v, h*D + d];  W_sum[h, v] = sum_d vocab_channels
    w_sum = jnp.sum(vocab_emb.astype(f32).reshape(V, H, D), axis=-1).T    # (H, V)
    wc = wf.T.astype(f32) @ w_sum                                         # (D, V)
    bc = bf.astype(f32) @ w_sum                                           # (V,)
    w_sum_t = w_sum.T                                                     # (V, H)
    inv_t = 1.0 / jnp.maximum(temps.astype(f32), 0.1)                     # clamp(min=0.1)

    # ---- tiling / padding (review item 5/6) ----------------------------------
    tv_eff = min(tv, ((V + 127) // 128) * 128)
    n_rb = pl.cdiv(M, tm)
    n_vb = pl.cdiv(V, tv_eff)
    M_pad = n_rb * tm
    V_pad = n_vb * tv_eff

    x_rows = jnp.pad(x.reshape(M, D).astype(f32), ((0, M_pad - M), (0, 0)))
    x_rows = x_rows.astype(matmul_dtype)
    wc_p = jnp.pad(wc, ((0, 0), (0, V_pad - V))).astype(matmul_dtype)     # (D, V_pad)
    bc_p = jnp.pad(bc, (0, V_pad - V), constant_values=_NEG_BIG).reshape(1, V_pad)
    wvt_p = jnp.pad(w_sum_t, ((0, V_pad - V), (0, 0))).astype(matmul_dtype)  # (V_pad, H)
    # Per-row 1/temperature repeats every H rows -> one constant (tm, 1) block
    # instead of an (M, 1) HBM array.
    itemp_blk = jnp.tile(inv_t, tm // H).reshape(tm, 1)

    out_rows = pl.pallas_call(
        _vocab_proj_kernel,
        out_shape=jax.ShapeDtypeStruct((M_pad, H), f32),
        grid_spec=pltpu.PrefetchScalarGridSpec(
            num_scalar_prefetch=0,
            grid=(n_rb, n_vb),
            in_specs=[
                pl.BlockSpec((tm, D), lambda i, j: (i, 0)),        # x rows (resident over j)
                pl.BlockSpec((D, tv_eff), lambda i, j: (0, j)),    # fused weight Wc
                pl.BlockSpec((1, tv_eff), lambda i, j: (0, j)),    # fused bias bc
                pl.BlockSpec((tv_eff, H), lambda i, j: (j, 0)),    # W_sum.T
                pl.BlockSpec((tm, 1), lambda i, j: (0, 0)),        # per-row 1/temperature
            ],
            out_specs=pl.BlockSpec((tm, H), lambda i, j: (i, 0)),
            scratch_shapes=[
                pltpu.VMEM((tm, 1), f32),   # running max
                pltpu.VMEM((tm, 1), f32),   # running sum
                pltpu.VMEM((tm, H), f32),   # unnormalized output accumulator
            ],
        ),
        compiler_params=pltpu.CompilerParams(
            dimension_semantics=("parallel", "arbitrary"),
            vmem_limit_bytes=vmem_limit_bytes,
        ),
    )(x_rows, wc_p, bc_p, wvt_p, itemp_blk)

    output = out_rows[:M].reshape(B, T, C)              # (B*T, H, H) -> (B, T, n_embd)
    reconstruction_loss = jnp.mean((output - x) ** 2)   # F.mse_loss(output, x_original)
    # dropout(p=0.0) == identity
    # TODO(synk): use_vocab_refinement branch not implemented (config default is False).
    return output, reconstruction_loss


def reference_jax(x, vocab_emb, wf, bf, temps):
    """Pure-JAX (f32) transliteration of the PyTorch forward, for verification."""
    B, T, C = x.shape
    H = temps.shape[0]
    D = C // H
    V = vocab_emb.shape[0]
    x_flat = x.reshape(B * T * H, D)
    ffn = x_flat @ wf.T + bf
    ffn_r = ffn.reshape(B * T, H, D)
    vocab_ch = vocab_emb.reshape(V, H, D).transpose(1, 0, 2)
    logits = jnp.einsum('bnh,hvd->bnv', ffn_r, vocab_ch)
    tc = jnp.maximum(temps, 0.1)[None, :, None]
    w = jax.nn.softmax(logits / tc, axis=-1)
    vo = jnp.einsum('bnv,hvd->bnh', w, vocab_ch)
    out = vo.reshape(B, T, C)
    loss = jnp.mean((out - x) ** 2)
    return out, loss


if __name__ == "__main__":
    # Small shapes consistent with the module: n_head == head_dim == 8 -> n_embd = 64.
    # M = B*T*H = 192 and V = 384 deliberately do NOT divide the tile sizes below,
    # so both the row-padding and vocab-padding / multi-tile online-softmax paths run.
    B, T = 2, 12
    H = 8           # n_head
    D = 8           # head_dim (must equal n_head for the reference einsum to be valid)
    C = H * D       # n_embd = 64
    V = 384         # vocab_size

    key = jax.random.PRNGKey(0)
    kx, kv, kw, kb, kt = jax.random.split(key, 5)
    x = jax.random.normal(kx, (B, T, C), dtype=jnp.float32)
    vocab_emb = 0.02 * jax.random.normal(kv, (V, C), dtype=jnp.float32)
    wf = (1.0 / jnp.sqrt(D)) * jax.random.normal(kw, (D, D), dtype=jnp.float32)
    bf = 0.01 * jax.random.normal(kb, (D,), dtype=jnp.float32)
    temps = 1.0 + 0.05 * jax.random.normal(kt, (H,), dtype=jnp.float32)

    out, loss = vocab_projection_ffn(x, vocab_emb, wf, bf, temps, tm=128, tv=256)
    out = jax.block_until_ready(out)
    loss = jax.block_until_ready(loss)

    ref_out, ref_loss = reference_jax(x, vocab_emb, wf, bf, temps)
    assert out.shape == (B, T, C)
    assert jnp.allclose(out, ref_out, atol=2e-3, rtol=2e-2), (
        "output mismatch: max abs err = %g"
        % float(jnp.max(jnp.abs(out - ref_out))))
    assert jnp.allclose(loss, ref_loss, atol=1e-3, rtol=1e-3), "loss mismatch"

    print("KERNEL_OK")
</pallas_src>

<mosaic_0001>
module attributes {stable_mosaic.version = 11 : i64} {
  func.func @_vocab_proj_kernel(%arg0: i32, %arg1: i32, %arg2: memref<128x8xbf16, #tpu.memory_space<vmem>>, %arg3: memref<8x256xbf16, #tpu.memory_space<vmem>>, %arg4: memref<1x256xf32, #tpu.memory_space<vmem>>, %arg5: memref<256x8xbf16, #tpu.memory_space<vmem>>, %arg6: memref<128x1xf32, #tpu.memory_space<vmem>>, %arg7: memref<128x8xf32, #tpu.memory_space<vmem>>, %arg8: memref<128x1xf32, #tpu.memory_space<vmem>>, %arg9: memref<128x1xf32, #tpu.memory_space<vmem>>, %arg10: memref<128x8xf32, #tpu.memory_space<vmem>>) attributes {dimension_semantics = [#tpu.dimension_semantics<parallel>, #tpu.dimension_semantics<arbitrary>], iteration_bounds = array<i64: 2, 2>, scalar_prefetch = 0 : i64, scratch_operands = 3 : i64, tpu.core_type = #tpu.core_type<tc>, window_params = [{transform_indices = @transform_0, window_bounds = array<i64: 128, 8>}, {transform_indices = @transform_1, window_bounds = array<i64: 8, 256>}, {transform_indices = @transform_2, window_bounds = array<i64: 1, 256>}, {transform_indices = @transform_3, window_bounds = array<i64: 256, 8>}, {pipeline_mode = #tpu.pipeline_mode<synchronous>, transform_indices = @transform_4, window_bounds = array<i64: 128, 1>}, {transform_indices = @transform_5, window_bounds = array<i64: 128, 8>}]} {
    %c0_i32 = arith.constant 0 : i32
    %0 = arith.cmpi eq, %arg1, %c0_i32 : i32
    %1 = arith.extui %0 : i1 to i32
    %c0_i32_0 = arith.constant 0 : i32
    %2 = arith.cmpi ne, %1, %c0_i32_0 : i32
    scf.if %2 {
      %cst_26 = arith.constant 0xFF800000 : f32
      %39 = vector.broadcast %cst_26 : f32 to vector<128x1xf32>
      %c0_27 = arith.constant 0 : index
      %c0_28 = arith.constant 0 : index
      %40 = vector.load %arg8[%c0_27, %c0_28] : memref<128x1xf32, #tpu.memory_space<vmem>>, vector<128x1xf32>
      tpu.vector_store %arg8[%c0_27, %c0_28], %39 {strides = array<i32>} : memref<128x1xf32, #tpu.memory_space<vmem>>, vector<128x1xf32>,
      %cst_29 = arith.constant 0.000000e+00 : f32
      %41 = vector.broadcast %cst_29 : f32 to vector<128x1xf32>
      %c0_30 = arith.constant 0 : index
      %c0_31 = arith.constant 0 : index
      %42 = vector.load %arg9[%c0_30, %c0_31] : memref<128x1xf32, #tpu.memory_space<vmem>>, vector<128x1xf32>
      tpu.vector_store %arg9[%c0_30, %c0_31], %41 {strides = array<i32>} : memref<128x1xf32, #tpu.memory_space<vmem>>, vector<128x1xf32>,
      %cst_32 = arith.constant 0.000000e+00 : f32
      %43 = vector.broadcast %cst_32 : f32 to vector<128x8xf32>
      %c0_33 = arith.constant 0 : index
      %c0_34 = arith.constant 0 : index
      %44 = vector.load %arg10[%c0_33, %c0_34] : memref<128x8xf32, #tpu.memory_space<vmem>>, vector<128x8xf32>
      tpu.vector_store %arg10[%c0_33, %c0_34], %43 {strides = array<i32>} : memref<128x8xf32, #tpu.memory_space<vmem>>, vector<128x8xf32>,
    } else {
    }
    %c0 = arith.constant 0 : index
    %c0_1 = arith.constant 0 : index
    %3 = vector.load %arg2[%c0, %c0_1] : memref<128x8xbf16, #tpu.memory_space<vmem>>, vector<128x8xbf16>
    %c0_2 = arith.constant 0 : index
    %c0_3 = arith.constant 0 : index
    %4 = vector.load %arg3[%c0_2, %c0_3] : memref<8x256xbf16, #tpu.memory_space<vmem>>, vector<8x256xbf16>
    %cst = arith.constant dense<0.000000e+00> : vector<128x256xf32>
    %5 = tpu.matmul %3, %4, %cst {dimension_numbers = #tpu.dot_dimension_numbers<[1], [0], [0], [1], [0, 0, 1, 1], [], []>} : vector<128x8xbf16>, vector<8x256xbf16>, vector<128x256xf32> -> vector<128x256xf32>
    %c0_4 = arith.constant 0 : index
    %c0_5 = arith.constant 0 : index
    %6 = vector.load %arg4[%c0_4, %c0_5] : memref<1x256xf32, #tpu.memory_space<vmem>>, vector<1x256xf32>
    %7 = vector.broadcast %6 : vector<1x256xf32> to vector<128x256xf32>
    %8 = arith.addf %5, %7 : vector<128x256xf32>
    %c0_6 = arith.constant 0 : index
    %c0_7 = arith.constant 0 : index
    %9 = vector.load %arg6[%c0_6, %c0_7] : memref<128x1xf32, #tpu.memory_space<vmem>>, vector<128x1xf32>
    %10 = vector.broadcast %9 : vector<128x1xf32> to vector<128x256xf32>
    %11 = arith.mulf %8, %10 : vector<128x256xf32>
    %c0_8 = arith.constant 0 : index
    %c0_9 = arith.constant 0 : index
    %12 = vector.load %arg8[%c0_8, %c0_9] : memref<128x1xf32, #tpu.memory_space<vmem>>, vector<128x1xf32>
    %cst_10 = arith.constant dense<0xFF800000> : vector<128xf32>
    %13 = vector.multi_reduction <maximumf>, %11, %cst_10 [1] : vector<128x256xf32> to vector<128xf32>
    %14 = vector.shape_cast %13 : vector<128xf32> to vector<128x1xf32>
    %15 = arith.maximumf %12, %14 : vector<128x1xf32>
    %16 = arith.subf %12, %15 : vector<128x1xf32>
    %17 = math.exp %16 : vector<128x1xf32>
    %18 = vector.broadcast %15 : vector<128x1xf32> to vector<128x256xf32>
    %19 = arith.subf %11, %18 : vector<128x256xf32>
    %20 = math.exp %19 : vector<128x256xf32>
    %c0_11 = arith.constant 0 : index
    %c0_12 = arith.constant 0 : index
    %21 = vector.load %arg9[%c0_11, %c0_12] : memref<128x1xf32, #tpu.memory_space<vmem>>, vector<128x1xf32>
    %22 = arith.mulf %17, %21 : vector<128x1xf32>
    %cst_13 = arith.constant dense<0.000000e+00> : vector<128xf32>
    %23 = vector.multi_reduction <add>, %20, %cst_13 [1] : vector<128x256xf32> to vector<128xf32>
    %24 = vector.shape_cast %23 : vector<128xf32> to vector<128x1xf32>
    %25 = arith.addf %22, %24 : vector<128x1xf32>
    %c0_14 = arith.constant 0 : index
    %c0_15 = arith.constant 0 : index
    %26 = vector.load %arg9[%c0_14, %c0_15] : memref<128x1xf32, #tpu.memory_space<vmem>>, vector<128x1xf32>
    tpu.vector_store %arg9[%c0_14, %c0_15], %25 {strides = array<i32>} : memref<128x1xf32, #tpu.memory_space<vmem>>, vector<128x1xf32>,
    %c0_16 = arith.constant 0 : index
    %c0_17 = arith.constant 0 : index
    %27 = vector.load %arg10[%c0_16, %c0_17] : memref<128x8xf32, #tpu.memory_space<vmem>>, vector<128x8xf32>
    %28 = vector.broadcast %17 : vector<128x1xf32> to vector<128x8xf32>
    %29 = arith.mulf %28, %27 : vector<128x8xf32>
    %30 = arith.truncf %20 : vector<128x256xf32> to vector<128x256xbf16>
    %c0_18 = arith.constant 0 : index
    %c0_19 = arith.constant 0 : index
    %31 = vector.load %arg5[%c0_18, %c0_19] : memref<256x8xbf16, #tpu.memory_space<vmem>>, vector<256x8xbf16>
    %cst_20 = arith.constant dense<0.000000e+00> : vector<128x8xf32>
    %32 = tpu.matmul %30, %31, %cst_20 {dimension_numbers = #tpu.dot_dimension_numbers<[1], [0], [0], [1], [0, 0, 1, 1], [], []>} : vector<128x256xbf16>, vector<256x8xbf16>, vector<128x8xf32> -> vector<128x8xf32>
    %33 = arith.addf %29, %32 : vector<128x8xf32>
    %c0_21 = arith.constant 0 : index
    %c0_22 = arith.constant 0 : index
    %34 = vector.load %arg10[%c0_21, %c0_22] : memref<128x8xf32, #tpu.memory_space<vmem>>, vector<128x8xf32>
    tpu.vector_store %arg10[%c0_21, %c0_22], %33 {strides = array<i32>} : memref<128x8xf32, #tpu.memory_space<vmem>>, vector<128x8xf32>,
    %c0_23 = arith.constant 0 : index
    %c0_24 = arith.constant 0 : index
    %35 = vector.load %arg8[%c0_23, %c0_24] : memref<128x1xf32, #tpu.memory_space<vmem>>, vector<128x1xf32>
    tpu.vector_store %arg8[%c0_23, %c0_24], %15 {strides = array<i32>} : memref<128x1xf32, #tpu.memory_space<vmem>>, vector<128x1xf32>,
    %c1_i32 = arith.constant 1 : i32
    %36 = arith.cmpi eq, %arg1, %c1_i32 : i32
    %37 = arith.extui %36 : i1 to i32
    %c0_i32_25 = arith.constant 0 : i32
    %38 = arith.cmpi ne, %37, %c0_i32_25 : i32
    scf.if %38 {
      %c0_26 = arith.constant 0 : index
      %c0_27 = arith.constant 0 : index
      %39 = vector.load %arg9[%c0_26, %c0_27] : memref<128x1xf32, #tpu.memory_space<vmem>>, vector<128x1xf32>
      %40 = tpu.reciprocal %39 {approx = true} : vector<128x1xf32> -> vector<128x1xf32>
      %c0_28 = arith.constant 0 : index
      %c0_29 = arith.constant 0 : index
      %41 = vector.load %arg10[%c0_28, %c0_29] : memref<128x8xf32, #tpu.memory_space<vmem>>, vector<128x8xf32>
      %42 = vector.broadcast %40 : vector<128x1xf32> to vector<128x8xf32>
      %43 = arith.mulf %41, %42 : vector<128x8xf32>
      %c0_30 = arith.constant 0 : index
      %c0_31 = arith.constant 0 : index
      %44 = vector.load %arg7[%c0_30, %c0_31] : memref<128x8xf32, #tpu.memory_space<vmem>>, vector<128x8xf32>
      tpu.vector_store %arg7[%c0_30, %c0_31], %43 {strides = array<i32>} : memref<128x8xf32, #tpu.memory_space<vmem>>, vector<128x8xf32>,
    } else {
    }
    return
  }
  func.func @transform_0(%arg0: i32, %arg1: i32) -> (i32, i32) {
    %c0_i32 = arith.constant 0 : i32
    %c0_i32_0 = arith.constant 0 : i32
    return %arg0, %c0_i32 : i32, i32
  }
  func.func @transform_1(%arg0: i32, %arg1: i32) -> (i32, i32) {
    %c0_i32 = arith.constant 0 : i32
    %c0_i32_0 = arith.constant 0 : i32
    return %c0_i32, %arg1 : i32, i32
  }
  func.func @transform_2(%arg0: i32, %arg1: i32) -> (i32, i32) {
    %c0_i32 = arith.constant 0 : i32
    %c0_i32_0 = arith.constant 0 : i32
    return %c0_i32, %arg1 : i32, i32
  }
  func.func @transform_3(%arg0: i32, %arg1: i32) -> (i32, i32) {
    %c0_i32 = arith.constant 0 : i32
    %c0_i32_0 = arith.constant 0 : i32
    return %arg1, %c0_i32 : i32, i32
  }
  func.func @transform_4(%arg0: i32, %arg1: i32) -> (i32, i32) {
    %c0_i32 = arith.constant 0 : i32
    %c0_i32_0 = arith.constant 0 : i32
    %c0_i32_1 = arith.constant 0 : i32
    return %c0_i32, %c0_i32_0 : i32, i32
  }
  func.func @transform_5(%arg0: i32, %arg1: i32) -> (i32, i32) {
    %c0_i32 = arith.constant 0 : i32
    %c0_i32_0 = arith.constant 0 : i32
    return %arg0, %c0_i32 : i32, i32
  }
}

</mosaic_0001>

<llo_original>
// kernel: tpu_custom_call.1
$region0: #{tpu_custom_call.1}
  #allocation0 [shape = 'u32[]', space=smem, size = 0x4, offset = 0x4, fixed_abs, tag = 'smem constant byte address 0x4 - core index']
  #allocation1 [shape = 'u32[72,128]{1,0:T(1,128)}', space=vmem, size = 0x9000, scoped, tag = 'internal scratch']
  #allocation2 [shape = 'f32[128,1]{1,0:T(8,128)}', space=vmem, size = 0x10000, scoped, tag = 'scratch operand']
  #allocation3 [shape = 'f32[128,1]{1,0:T(8,128)}', space=vmem, size = 0x10000, scoped, tag = 'scratch operand']
  #allocation4 [shape = 'f32[128,8]{1,0:T(8,128)}', space=vmem, size = 0x10000, scoped, tag = 'scratch operand']
  %s0 = inlined_call_operand.vmem [shape: bf16[256,8], index: 0, kind: input, shape index: {}]
  %s1 = inlined_call_operand.vmem [shape: bf16[8,512], index: 1, kind: input, shape index: {}]
  %s2 = inlined_call_operand.vmem [shape: f32[1,512], index: 2, kind: input, shape index: {}]
  %s3 = inlined_call_operand.vmem [shape: bf16[512,8], index: 3, kind: input, shape index: {}]
  %s4 = inlined_call_operand.vmem [shape: f32[128,1], index: 4, kind: input, shape index: {}]
  %s5 = inlined_call_operand.vmem [shape: f32[256,8], index: 5, kind: output, shape index: {}]
  %s6 = sld [smem:[#allocation0]]
  $region61: #{tpu_custom_call.1} parent=0
    _
  %s8 = ssub.s32 1, %s6
  %s9 = scalar_select 0, %s8, %s6
  loop: start=0, step=1, limit=6
  $region2: #{tpu_custom_call.1} parent=0 // loop_pre_header
    _
  $region3: #{tpu_custom_call.1} parent=0 // loop_header
    %s11 = sphi 0, %s15
    %p12 = scmp.ge.s32.totalorder %s11, 6
    %s18 = sphi 0, %s30
    %s19 = sphi 0, %s26
    %s20 = sphi 0, %s18
    %s21 = sphi 0, %s19
    %s22 = sphi 0, %s20
    %s23 = sphi 0, %s21
    %s33 = sphi 0, %s35
    %s36 = sphi 0, %s33
    %s37 = sphi 0, %s36
    %s53 = sphi 0, %s37
    %s59 = sphi 0, %s61
    %s62 = sphi 0, %s59
    %s63 = sphi 0, %s62
    %s79 = sphi 0, %s63
    %s85 = sphi 0, %s87
    %s88 = sphi 0, %s85
    %s89 = sphi 0, %s88
    %s105 = sphi 0, %s89
    %s111 = sphi 0, %s113
    %s114 = sphi 0, %s111
    %s115 = sphi 0, %s114
    %s131 = sphi 0, %s115
    %s135 = sphi 0, %s135
    %s137 = sphi 0, %s135
    %s138 = sphi 0, %s137
    %s152 = sphi 0, %s138
    %s158 = sphi 0, %s160
    %s161 = sphi 0, %s158
    %s162 = sphi 0, %s161
    %s178 = sphi 0, %s162
  $region4: #{tpu_custom_call.1} parent=0 // loop_header_branch
    %14 = sbr.rel (%p12) target = $region8
  $region5: #{tpu_custom_call.1} parent=0 // loop_body
    %s16 = ssub.s32 %s11, 1
    %s17 = ssub.s32 %s11, 2
    %s24 = sadd.s32 1, %s19
    %p25 = scmp.ge.s32.totalorder %s24, 2
    %s26 = scalar_select %p25, 0, %s24
    %s27 = sadd.s32 1, %s18
    %s28 = scalar_select %p25, %s27, %s18
    %p29 = scmp.ge.s32.totalorder %s28, 2
    %s30 = scalar_select %p29, 0, %s28
    %s31 = ssub.s32 %s18, %s30
    %p32 = scmp.eq.s32.totalorder %s31, 0
    %s34 = sadd.s32 %s33, 1
    %s35 = scalar_select %p32, %s33, %s34
    %p38 = pneg %p32
    %p39 = scmp.eq.s32.totalorder %s11, 3
    %p40 = por %p38, %p39
    %p41 = scmp.ne.s32.totalorder %s33, %s36
    %p42 = scmp.eq.s32.totalorder %s11, 0
    %p43 = por %p41, %p42
    %p44 = scmp.ne.s32.totalorder %s33, %s36
    %p45 = scmp.eq.s32.totalorder %s16, 3
    %p46 = por %p44, %p45
    %p47 = scmp.ne.s32.totalorder %s36, %s37
    %p48 = scmp.eq.s32.totalorder %s16, 0
    %p49 = por %p47, %p48
    %p50 = scmp.ne.s32.totalorder %s36, %s37
    %p51 = scmp.eq.s32.totalorder %s17, 3
    %p52 = por %p50, %p51
    %p54 = scmp.ne.s32.totalorder %s37, %s53
    %p55 = scmp.eq.s32.totalorder %s17, 0
    %p56 = por %p54, %p55
    %s57 = ssub.s32 %s19, %s26
    %p58 = scmp.eq.s32.totalorder %s57, 0
    %s60 = sadd.s32 %s59, 1
    %s61 = scalar_select %p58, %s59, %s60
    %p64 = pneg %p58
    %p65 = scmp.eq.s32.totalorder %s11, 3
    %p66 = por %p64, %p65
    %p67 = scmp.ne.s32.totalorder %s59, %s62
    %p68 = scmp.eq.s32.totalorder %s11, 0
    %p69 = por %p67, %p68
    %p70 = scmp.ne.s32.totalorder %s59, %s62
    %p71 = scmp.eq.s32.totalorder %s16, 3
    %p72 = por %p70, %p71
    %p73 = scmp.ne.s32.totalorder %s62, %s63
    %p74 = scmp.eq.s32.totalorder %s16, 0
    %p75 = por %p73, %p74
    %p76 = scmp.ne.s32.totalorder %s62, %s63
    %p77 = scmp.eq.s32.totalorder %s17, 3
    %p78 = por %p76, %p77
    %p80 = scmp.ne.s32.totalorder %s63, %s79
    %p81 = scmp.eq.s32.totalorder %s17, 0
    %p82 = por %p80, %p81
    %s83 = ssub.s32 %s19, %s26
    %p84 = scmp.eq.s32.totalorder %s83, 0
    %s86 = sadd.s32 %s85, 1
    %s87 = scalar_select %p84, %s85, %s86
    %p90 = pneg %p84
    %p91 = scmp.eq.s32.totalorder %s11, 3
    %p92 = por %p90, %p91
    %p93 = scmp.ne.s32.totalorder %s85, %s88
    %p94 = scmp.eq.s32.totalorder %s11, 0
    %p95 = por %p93, %p94
    %p96 = scmp.ne.s32.totalorder %s85, %s88
    %p97 = scmp.eq.s32.totalorder %s16, 3
    %p98 = por %p96, %p97
    %p99 = scmp.ne.s32.totalorder %s88, %s89
    %p100 = scmp.eq.s32.totalorder %s16, 0
    %p101 = por %p99, %p100
    %p102 = scmp.ne.s32.totalorder %s88, %s89
    %p103 = scmp.eq.s32.totalorder %s17, 3
    %p104 = por %p102, %p103
    %p106 = scmp.ne.s32.totalorder %s89, %s105
    %p107 = scmp.eq.s32.totalorder %s17, 0
    %p108 = por %p106, %p107
    %s109 = ssub.s32 %s19, %s26
    %p110 = scmp.eq.s32.totalorder %s109, 0
    %s112 = sadd.s32 %s111, 1
    %s113 = scalar_select %p110, %s111, %s112
    %p116 = pneg %p110
    %p117 = scmp.eq.s32.totalorder %s11, 3
    %p118 = por %p116, %p117
    %p119 = scmp.ne.s32.totalorder %s111, %s114
    %p120 = scmp.eq.s32.totalorder %s11, 0
    %p121 = por %p119, %p120
    %p122 = scmp.ne.s32.totalorder %s111, %s114
    %p123 = scmp.eq.s32.totalorder %s16, 3
    %p124 = por %p122, %p123
    %p125 = scmp.ne.s32.totalorder %s114, %s115
    %p126 = scmp.eq.s32.totalorder %s16, 0
    %p127 = por %p125, %p126
    %p128 = scmp.ne.s32.totalorder %s114, %s115
    %p129 = scmp.eq.s32.totalorder %s17, 3
    %p130 = por %p128, %p129
    %p132 = scmp.ne.s32.totalorder %s115, %s131
    %p133 = scmp.eq.s32.totalorder %s17, 0
    %p134 = por %p132, %p133
    %s136 = sadd.s32 %s135, 1
    %p139 = scmp.eq.s32.totalorder %s11, 3
    %p140 = scmp.ne.s32.totalorder %s135, %s137
    %p141 = scmp.eq.s32.totalorder %s11, 0
    %p142 = por %p140, %p141
    %p143 = scmp.ne.s32.totalorder %s135, %s137
    %p144 = scmp.eq.s32.totalorder %s16, 3
    %p145 = por %p143, %p144
    %p146 = scmp.ne.s32.totalorder %s137, %s138
    %p147 = scmp.eq.s32.totalorder %s16, 0
    %p148 = por %p146, %p147
    %p149 = scmp.ne.s32.totalorder %s137, %s138
    %p150 = scmp.eq.s32.totalorder %s17, 3
    %p151 = por %p149, %p150
    %p153 = scmp.ne.s32.totalorder %s138, %s152
    %p154 = scmp.eq.s32.totalorder %s17, 0
    %p155 = por %p153, %p154
    %s156 = ssub.s32 %s18, %s30
    %p157 = scmp.eq.s32.totalorder %s156, 0
    %s159 = sadd.s32 %s158, 1
    %s160 = scalar_select %p157, %s158, %s159
    %p163 = pneg %p157
    %p164 = scmp.eq.s32.totalorder %s11, 3
    %p165 = por %p163, %p164
    %p166 = scmp.ne.s32.totalorder %s158, %s161
    %p167 = scmp.eq.s32.totalorder %s11, 0
    %p168 = por %p166, %p167
    %p169 = scmp.ne.s32.totalorder %s158, %s161
    %p170 = scmp.eq.s32.totalorder %s16, 3
    %p171 = por %p169, %p170
    %p172 = scmp.ne.s32.totalorder %s161, %s162
    %p173 = scmp.eq.s32.totalorder %s16, 0
    %p174 = por %p172, %p173
    %p175 = scmp.ne.s32.totalorder %s161, %s162
    %p176 = scmp.eq.s32.totalorder %s17, 3
    %p177 = por %p175, %p176
    %p179 = scmp.ne.s32.totalorder %s162, %s178
    %p180 = scmp.eq.s32.totalorder %s17, 0
    %p181 = por %p179, %p180
    %p182 = scmp.le.s32.totalorder 1, %s11
    %p183 = scmp.lt.s32.totalorder %s11, 5
    %p184 = pnand %p182, %p183
    %p185 = pneg %p184
    // Predicated region
    $region9: #{tpu_custom_call.1} parent=5 // pred_check
      _
    $region10: #{tpu_custom_call.1} parent=5 // pred_check_branch
      %187 = sbr.rel (%p184) target = $region12
    $region11: #{tpu_custom_call.1} parent=5 // pred_region
      %s188 = ssub.s32 %s11, 1
      // Predicated region
      $region13: #{tpu_custom_call.1} parent=11 // pred_check
        %p189 = pneg %p148
      $region14: #{tpu_custom_call.1} parent=11 // pred_check_branch
        %191 = sbr.rel (%p189) target = $region16
      $region15: #{tpu_custom_call.1} parent=11 // pred_region
        _
      $region16: #{tpu_custom_call.1} parent=11 // pred_fallthru
        _
    $region12: #{tpu_custom_call.1} parent=5 // pred_fallthru
      _
    %p192 = scmp.lt.s32.totalorder %s11, 4
    // Predicated region
    $region17: #{tpu_custom_call.1} parent=5 // pred_check
      %p193 = pneg %p192
    $region18: #{tpu_custom_call.1} parent=5 // pred_check_branch
      %195 = sbr.rel (%p193) target = $region20
    $region19: #{tpu_custom_call.1} parent=5 // pred_region
      // Predicated region
      $region21: #{tpu_custom_call.1} parent=19 // pred_check
        %p196 = pneg %p43
      $region22: #{tpu_custom_call.1} parent=19 // pred_check_branch
        %198 = sbr.rel (%p196) target = $region24
      $region23: #{tpu_custom_call.1} parent=19 // pred_region
        %s199 = smul.u32 16, %s18
        %p200 = scmp.lt.s32.totalorder %s199, 31
        %s201 = scalar_select %p200, %s199, 31
        %s202 = smul.addr %s201, 4
        %s203 = scalar_lea.vmem %s0, %s202
        %s204 = smul.u32 16, %s18
      $region24: #{tpu_custom_call.1} parent=19 // pred_fallthru
        _
      // Predicated region
      $region25: #{tpu_custom_call.1} parent=19 // pred_check
        %p205 = pneg %p69
      $region26: #{tpu_custom_call.1} parent=19 // pred_check_branch
        %207 = sbr.rel (%p205) target = $region28
      $region27: #{tpu_custom_call.1} parent=19 // pred_region
        %s208 = smul.u32 2, %s19
        %p209 = scmp.lt.s32.totalorder %s208, 3
        %s210 = scalar_select %p209, %s208, 3
        %s211 = smul.addr %s210, 4
        %s212 = scalar_lea.vmem %s1, %s211
        %s213 = smul.u32 2, %s19
      $region28: #{tpu_custom_call.1} parent=19 // pred_fallthru
        _
      // Predicated region
      $region29: #{tpu_custom_call.1} parent=19 // pred_check
        %p214 = pneg %p95
      $region30: #{tpu_custom_call.1} parent=19 // pred_check_branch
        %216 = sbr.rel (%p214) target = $region32
      $region31: #{tpu_custom_call.1} parent=19 // pred_region
        %s217 = smul.u32 2, %s19
        %p218 = scmp.lt.s32.totalorder %s217, 3
        %s219 = scalar_select %p218, %s217, 3
        %s220 = scalar_lea.vmem %s2, %s219
        %s221 = smul.u32 2, %s19
      $region32: #{tpu_custom_call.1} parent=19 // pred_fallthru
        _
      // Predicated region
      $region33: #{tpu_custom_call.1} parent=19 // pred_check
        %p222 = pneg %p121
      $region34: #{tpu_custom_call.1} parent=19 // pred_check_branch
        %224 = sbr.rel (%p222) target = $region36
      $region35: #{tpu_custom_call.1} parent=19 // pred_region
        %s225 = smul.u32 32, %s19
        %p226 = scmp.lt.s32.totalorder %s225, 63
        %s227 = scalar_select %p226, %s225, 63
        %s228 = smul.addr %s227, 4
        %s229 = scalar_lea.vmem %s3, %s228
        %s230 = smul.u32 32, %s19
      $region36: #{tpu_custom_call.1} parent=19 // pred_fallthru
        _
    $region20: #{tpu_custom_call.1} parent=5 // pred_fallthru
      _
    %p231 = scmp.le.s32.totalorder 1, %s11
    %p232 = scmp.lt.s32.totalorder %s11, 5
    %p233 = pnand %p231, %p232
    %p234 = pneg %p233
    // Predicated region
    $region37: #{tpu_custom_call.1} parent=5 // pred_check
      _
    $region38: #{tpu_custom_call.1} parent=5 // pred_check_branch
      %236 = sbr.rel (%p233) target = $region40
    $region39: #{tpu_custom_call.1} parent=5 // pred_region
      %s237 = ssub.s32 %s11, 1
      %s238 = smul.u32 16, %s20
      %p239 = scmp.lt.s32.totalorder %s238, 31
      %s240 = scalar_select %p239, %s238, 31
      %s241 = smul.addr %s240, 4
      %s242 = scalar_lea.vmem %s0, %s241
      %p243 = pneg %p49
      %p244 = pneg %p46
      %s245 = smul.u32 2, %s21
      %p246 = scmp.lt.s32.totalorder %s245, 3
      %s247 = scalar_select %p246, %s245, 3
      %s248 = smul.addr %s247, 4
      %s249 = scalar_lea.vmem %s1, %s248
      %p250 = pneg %p75
      %p251 = pneg %p72
      %s252 = smul.u32 2, %s21
      %p253 = scmp.lt.s32.totalorder %s252, 3
      %s254 = scalar_select %p253, %s252, 3
      %s255 = scalar_lea.vmem %s2, %s254
      %p256 = pneg %p101
      %p257 = pneg %p98
      %s258 = smul.u32 32, %s21
      %p259 = scmp.lt.s32.totalorder %s258, 63
      %s260 = scalar_select %p259, %s258, 63
      %s261 = smul.addr %s260, 4
      %s262 = scalar_lea.vmem %s3, %s261
      %p263 = pneg %p127
      %p264 = pneg %p124
      %p265 = pneg %p148
      %p266 = pneg %p145
      %p267 = pneg %p174
      %p268 = pneg %p171
      %s269 = smul.u32 16, %s20
      %p270 = scmp.lt.s32.totalorder %s269, 31
      %s271 = scalar_select %p270, %s269, 31
      %s272 = smul.addr %s271, 8
      %s273 = scalar_lea.vmem %s5, %s272
      %s274 = smul.u32 16, %s20
      %p275 = scmp.lt.s32.totalorder %s274, 31
      %s276 = scalar_select %p275, %s274, 31
      %s277 = smul.addr %s276, 4
      %s278 = scalar_lea.vmem %s0, %s277
      %s279 = smul.u32 16, %s20
      %s280 = smul.u32 2, %s21
      %p281 = scmp.lt.s32.totalorder %s280, 3
      %s282 = scalar_select %p281, %s280, 3
      %s283 = smul.addr %s282, 4
      %s284 = scalar_lea.vmem %s1, %s283
      %s285 = smul.u32 2, %s21
      %s286 = smul.u32 2, %s21
      %p287 = scmp.lt.s32.totalorder %s286, 3
      %s288 = scalar_select %p287, %s286, 3
      %s289 = scalar_lea.vmem %s2, %s288
      %s290 = smul.u32 2, %s21
      %s291 = smul.u32 32, %s21
      %p292 = scmp.lt.s32.totalorder %s291, 63
      %s293 = scalar_select %p292, %s291, 63
      %s294 = smul.addr %s293, 4
      %s295 = scalar_lea.vmem %s3, %s294
      %s296 = smul.u32 32, %s21
      %s297 = smul.u32 16, %s20
      %p298 = scmp.lt.s32.totalorder %s297, 31
      %s299 = scalar_select %p298, %s297, 31
      %s300 = smul.addr %s299, 8
      %s301 = scalar_lea.vmem %s5, %s300
      %s302 = smul.u32 16, %s20
      %p304 = scmp.eq.s32.totalorder %s21, 0
      // Predicated region
      $region41: #{tpu_custom_call.1} parent=39 // pred_check
        %p305 = pneg %p304
      $region42: #{tpu_custom_call.1} parent=39 // pred_check_branch
        %307 = sbr.rel (%p305) target = $region44
      $region43: #{tpu_custom_call.1} parent=39 // pred_region
        %vm308 = vcmask 7168
        %309 = vst.msk [vmem:[#allocation2] sm:$0xff] %vm308, -inf
        %310 = vst.msk [vmem:[#allocation2 + $0x8] sm:$0xff] %vm308, -inf
        %311 = vst.msk [vmem:[#allocation2 + $0x10] sm:$0xff] %vm308, -inf
        %312 = vst.msk [vmem:[#allocation2 + $0x18] sm:$0xff] %vm308, -inf
        %313 = vst.msk [vmem:[#allocation2 + $0x20] sm:$0xff] %vm308, -inf
        %314 = vst.msk [vmem:[#allocation2 + $0x28] sm:$0xff] %vm308, -inf
        %315 = vst.msk [vmem:[#allocation2 + $0x30] sm:$0xff] %vm308, -inf
        %316 = vst.msk [vmem:[#allocation2 + $0x38] sm:$0xff] %vm308, -inf
        %317 = vst.msk [vmem:[#allocation2 + $0x40] sm:$0xff] %vm308, -inf
        %318 = vst.msk [vmem:[#allocation2 + $0x48] sm:$0xff] %vm308, -inf
        %319 = vst.msk [vmem:[#allocation2 + $0x50] sm:$0xff] %vm308, -inf
        %320 = vst.msk [vmem:[#allocation2 + $0x58] sm:$0xff] %vm308, -inf
        %321 = vst.msk [vmem:[#allocation2 + $0x60] sm:$0xff] %vm308, -inf
        %322 = vst.msk [vmem:[#allocation2 + $0x68] sm:$0xff] %vm308, -inf
        %323 = vst.msk [vmem:[#allocation2 + $0x70] sm:$0xff] %vm308, -inf
        %324 = vst.msk [vmem:[#allocation2 + $0x78] sm:$0xff] %vm308, -inf
        %325 = vst.msk [vmem:[#allocation3] sm:$0xff] %vm308, 0.0
        %326 = vst.msk [vmem:[#allocation3 + $0x8] sm:$0xff] %vm308, 0.0
        %327 = vst.msk [vmem:[#allocation3 + $0x10] sm:$0xff] %vm308, 0.0
        %328 = vst.msk [vmem:[#allocation3 + $0x18] sm:$0xff] %vm308, 0.0
        %329 = vst.msk [vmem:[#allocation3 + $0x20] sm:$0xff] %vm308, 0.0
        %330 = vst.msk [vmem:[#allocation3 + $0x28] sm:$0xff] %vm308, 0.0
        %331 = vst.msk [vmem:[#allocation3 + $0x30] sm:$0xff] %vm308, 0.0
        %332 = vst.msk [vmem:[#allocation3 + $0x38] sm:$0xff] %vm308, 0.0
        %333 = vst.msk [vmem:[#allocation3 + $0x40] sm:$0xff] %vm308, 0.0
        %334 = vst.msk [vmem:[#allocation3 + $0x48] sm:$0xff] %vm308, 0.0
        %335 = vst.msk [vmem:[#allocation3 + $0x50] sm:$0xff] %vm308, 0.0
        %336 = vst.msk [vmem:[#allocation3 + $0x58] sm:$0xff] %vm308, 0.0
        %337 = vst.msk [vmem:[#allocation3 + $0x60] sm:$0xff] %vm308, 0.0
        %338 = vst.msk [vmem:[#allocation3 + $0x68] sm:$0xff] %vm308, 0.0
        %339 = vst.msk [vmem:[#allocation3 + $0x70] sm:$0xff] %vm308, 0.0
        %340 = vst.msk [vmem:[#allocation3 + $0x78] sm:$0xff] %vm308, 0.0
        %vm341 = vcmask 64512
        %342 = vst.msk [vmem:[#allocation4] sm:$0xff] %vm341, 0.0
        %343 = vst.msk [vmem:[#allocation4 + $0x8] sm:$0xff] %vm341, 0.0
        %344 = vst.msk [vmem:[#allocation4 + $0x10] sm:$0xff] %vm341, 0.0
        %345 = vst.msk [vmem:[#allocation4 + $0x18] sm:$0xff] %vm341, 0.0
        %346 = vst.msk [vmem:[#allocation4 + $0x20] sm:$0xff] %vm341, 0.0
        %347 = vst.msk [vmem:[#allocation4 + $0x28] sm:$0xff] %vm341, 0.0
        %348 = vst.msk [vmem:[#allocation4 + $0x30] sm:$0xff] %vm341, 0.0
        %349 = vst.msk [vmem:[#allocation4 + $0x38] sm:$0xff] %vm341, 0.0
        %350 = vst.msk [vmem:[#allocation4 + $0x40] sm:$0xff] %vm341, 0.0
        %351 = vst.msk [vmem:[#allocation4 + $0x48] sm:$0xff] %vm341, 0.0
        %352 = vst.msk [vmem:[#allocation4 + $0x50] sm:$0xff] %vm341, 0.0
        %353 = vst.msk [vmem:[#allocation4 + $0x58] sm:$0xff] %vm341, 0.0
        %354 = vst.msk [vmem:[#allocation4 + $0x60] sm:$0xff] %vm341, 0.0
        %355 = vst.msk [vmem:[#allocation4 + $0x68] sm:$0xff] %vm341, 0.0
        %356 = vst.msk [vmem:[#allocation4 + $0x70] sm:$0xff] %vm341, 0.0
        %357 = vst.msk [vmem:[#allocation4 + $0x78] sm:$0xff] %vm341, 0.0
      $region44: #{tpu_custom_call.1} parent=39 // pred_fallthru
        _
      %v358 = vld [vmem:[%s278] sm:$0xf]
      %v359 = vld [vmem:[%s278 + $0x4] sm:$0xf]
      %v360 = vld [vmem:[%s278 + $0x8] sm:$0xf]
      %v361 = vld [vmem:[%s278 + $0xc] sm:$0xf]
      %v362 = vld [vmem:[%s278 + $0x10] sm:$0xf]
      %v363 = vld [vmem:[%s278 + $0x14] sm:$0xf]
      %v364 = vld [vmem:[%s278 + $0x18] sm:$0xf]
      %v365 = vld [vmem:[%s278 + $0x1c] sm:$0xf]
      %v366 = vld [vmem:[%s278 + $0x20] sm:$0xf]
      %v367 = vld [vmem:[%s278 + $0x24] sm:$0xf]
      %v368 = vld [vmem:[%s278 + $0x28] sm:$0xf]
      %v369 = vld [vmem:[%s278 + $0x2c] sm:$0xf]
      %v370 = vld [vmem:[%s278 + $0x30] sm:$0xf]
      %v371 = vld [vmem:[%s278 + $0x34] sm:$0xf]
      %v372 = vld [vmem:[%s278 + $0x38] sm:$0xf]
      %v373 = vld [vmem:[%s278 + $0x3c] sm:$0xf]
      %v374 = vld [vmem:[%s284] sm:$0xff]
      %v375 = vld [vmem:[%s289] sm:$0x3]
      %v377 = vperm.slane %v375, 0
      %v378 = vperm.slane %v375, 1
      %v397 = vunpack.c.l.b16 %v358
      %v398 = vunpack.c.l.b16 %v359
      %v399 = vunpack.c.l.b16 %v360
      %v400 = vunpack.c.l.b16 %v361
      %v401 = vunpack.c.l.b16 %v362
      %v402 = vunpack.c.l.b16 %v363
      %v403 = vunpack.c.l.b16 %v364
      %v404 = vunpack.c.l.b16 %v365
      %v405 = vunpack.c.l.b16 %v366
      %v406 = vunpack.c.l.b16 %v367
      %v407 = vunpack.c.l.b16 %v368
      %v408 = vunpack.c.l.b16 %v369
      %v409 = vunpack.c.l.b16 %v370
      %v410 = vunpack.c.l.b16 %v371
      %v411 = vunpack.c.l.b16 %v372
      %v412 = vunpack.c.l.b16 %v373
      %v413 = vpack.c.b16 %v398, %v397
      %v414 = vpack.c.b16 %v400, %v399
      %v415 = vpack.c.b16 %v402, %v401
      %v416 = vpack.c.b16 %v404, %v403
      %v417 = vpack.c.b16 %v406, %v405
      %v418 = vpack.c.b16 %v408, %v407
      %v419 = vpack.c.b16 %v410, %v409
      %v420 = vpack.c.b16 %v412, %v411
      %v422 = vunpack.c.l.b16 %v374
      %v423 = vunpack.c.h.b16 %v374
      %v424 = vpack.c.b16 %v422, %v422
      %v425 = vpack.c.b16 %v423, %v423
      %vm426 = vcmask 64512
      %v428 = vsel %vm426, %v413, 0
      %v431 = vsel %vm426, %v414, 0
      %v434 = vsel %vm426, %v415, 0
      %v437 = vsel %vm426, %v416, 0
      %v440 = vsel %vm426, %v417, 0
      %v443 = vsel %vm426, %v418, 0
      %v446 = vsel %vm426, %v419, 0
      %v449 = vsel %vm426, %v420, 0
      %vm451 = vcmask 1043456
      %v453 = vsel %vm451, %v424, 0
      %v456 = vsel %vm451, %v425, 0
      %458 = vmatpush.bf16.msra.mxu0 0
      %459 = vmatpush.bf16.msra.mxu0 0
      %460 = vmatpush.bf16.msra.mxu0 0
      %461 = vmatpush.bf16.msra.mxu0 0
      %462 = vmatpush.bf16.msra.mxu0 0
      %463 = vmatpush.bf16.msra.mxu0 0
      %464 = vmatpush.bf16.msra.mxu0 0
      %465 = vmatpush.bf16.msra.mxu0 %v453
      %466 = vmatmul.bf16.gmra.mxu0 %v428
      %v467 = vpop.f32.mrf.mxu0
      %v468 = vadd.f32 %v377, %v467
      %v469 = vpop.f32.mrf.mxu0
      %v470 = vadd.f32 %v377, %v469
      %471 = vmatmul.bf16.gmra.mxu0 %v431
      %v472 = vpop.f32.mrf.mxu0
      %v473 = vadd.f32 %v377, %v472
      %v474 = vpop.f32.mrf.mxu0
      %v475 = vadd.f32 %v377, %v474
      %476 = vmatmul.bf16.gmra.mxu0 %v434
      %v477 = vpop.f32.mrf.mxu0
      %v478 = vadd.f32 %v377, %v477
      %v479 = vpop.f32.mrf.mxu0
      %v480 = vadd.f32 %v377, %v479
      %481 = vmatmul.bf16.gmra.mxu0 %v437
      %v482 = vpop.f32.mrf.mxu0
      %v483 = vadd.f32 %v377, %v482
      %v484 = vpop.f32.mrf.mxu0
      %v485 = vadd.f32 %v377, %v484
      %486 = vmatmul.bf16.gmra.mxu0 %v440
      %v487 = vpop.f32.mrf.mxu0
      %v488 = vadd.f32 %v377, %v487
      %v489 = vpop.f32.mrf.mxu0
      %v490 = vadd.f32 %v377, %v489
      %491 = vmatmul.bf16.gmra.mxu0 %v443
      %v492 = vpop.f32.mrf.mxu0
      %v493 = vadd.f32 %v377, %v492
      %v494 = vpop.f32.mrf.mxu0
      %v495 = vadd.f32 %v377, %v494
      %496 = vmatmul.bf16.gmra.mxu0 %v446
      %v497 = vpop.f32.mrf.mxu0
      %v498 = vadd.f32 %v377, %v497
      %v499 = vpop.f32.mrf.mxu0
      %v500 = vadd.f32 %v377, %v499
      %501 = vmatmul.bf16.gmra.mxu0 %v449
      %v502 = vpop.f32.mrf.mxu0
      %v503 = vadd.f32 %v377, %v502
      %v504 = vpop.f32.mrf.mxu0
      %v505 = vadd.f32 %v377, %v504
      %506 = vdwg.mxu0
      %507 = vmatpush.bf16.msra.mxu0 0
      %508 = vmatpush.bf16.msra.mxu0 0
      %509 = vmatpush.bf16.msra.mxu0 0
      %510 = vmatpush.bf16.msra.mxu0 0
      %511 = vmatpush.bf16.msra.mxu0 0
      %512 = vmatpush.bf16.msra.mxu0 0
      %513 = vmatpush.bf16.msra.mxu0 0
      %514 = vmatpush.bf16.msra.mxu0 %v456
      %515 = vmatmul.bf16.gmra.mxu0 %v428
      %v516 = vpop.f32.mrf.mxu0
      %v517 = vadd.f32 %v378, %v516
      %v518 = vpop.f32.mrf.mxu0
      %v519 = vadd.f32 %v378, %v518
      %520 = vmatmul.bf16.gmra.mxu0 %v431
      %v521 = vpop.f32.mrf.mxu0
      %v522 = vadd.f32 %v378, %v521
      %v523 = vpop.f32.mrf.mxu0
      %v524 = vadd.f32 %v378, %v523
      %525 = vmatmul.bf16.gmra.mxu0 %v434
      %v526 = vpop.f32.mrf.mxu0
      %v527 = vadd.f32 %v378, %v526
      %v528 = vpop.f32.mrf.mxu0
      %v529 = vadd.f32 %v378, %v528
      %530 = vmatmul.bf16.gmra.mxu0 %v437
      %v531 = vpop.f32.mrf.mxu0
      %v532 = vadd.f32 %v378, %v531
      %v533 = vpop.f32.mrf.mxu0
      %v534 = vadd.f32 %v378, %v533
      %535 = vmatmul.bf16.gmra.mxu0 %v440
      %v536 = vpop.f32.mrf.mxu0
      %v537 = vadd.f32 %v378, %v536
      %v538 = vpop.f32.mrf.mxu0
      %v539 = vadd.f32 %v378, %v538
      %540 = vmatmul.bf16.gmra.mxu0 %v443
      %v541 = vpop.f32.mrf.mxu0
      %v542 = vadd.f32 %v378, %v541
      %v543 = vpop.f32.mrf.mxu0
      %v544 = vadd.f32 %v378, %v543
      %545 = vmatmul.bf16.gmra.mxu0 %v446
      %v546 = vpop.f32.mrf.mxu0
      %v547 = vadd.f32 %v378, %v546
      %v548 = vpop.f32.mrf.mxu0
      %v549 = vadd.f32 %v378, %v548
      %550 = vmatmul.bf16.gmra.mxu0 %v449
      %v551 = vpop.f32.mrf.mxu0
      %v552 = vadd.f32 %v378, %v551
      %v553 = vpop.f32.mrf.mxu0
      %v554 = vadd.f32 %v378, %v553
      %555 = vdwg.mxu0
      %v556 = vld [vmem:[%s4] sm:$0xff]
      %v557 = vld [vmem:[%s4 + $0x8] sm:$0xff]
      %v558 = vld [vmem:[%s4 + $0x10] sm:$0xff]
      %v559 = vld [vmem:[%s4 + $0x18] sm:$0xff]
      %v560 = vld [vmem:[%s4 + $0x20] sm:$0xff]
      %v561 = vld [vmem:[%s4 + $0x28] sm:$0xff]
      %v562 = vld [vmem:[%s4 + $0x30] sm:$0xff]
      %v563 = vld [vmem:[%s4 + $0x38] sm:$0xff]
      %v564 = vld [vmem:[%s4 + $0x40] sm:$0xff]
      %v565 = vld [vmem:[%s4 + $0x48] sm:$0xff]
      %v566 = vld [vmem:[%s4 + $0x50] sm:$0xff]
      %v567 = vld [vmem:[%s4 + $0x58] sm:$0xff]
      %v568 = vld [vmem:[%s4 + $0x60] sm:$0xff]
      %v569 = vld [vmem:[%s4 + $0x68] sm:$0xff]
      %v570 = vld [vmem:[%s4 + $0x70] sm:$0xff]
      %v571 = vld [vmem:[%s4 + $0x78] sm:$0xff]
      %573 = vset.pattern.permute.xlu0 0
      %574 = vperm.xlu0 %573, %v556
      %v575 = vpop.permute.xlu0 %574
      %578 = vset.pattern.permute.xlu0 0
      %579 = vperm.xlu0 %578, %v557
      %v580 = vpop.permute.xlu0 %579
      %583 = vset.pattern.permute.xlu0 0
      %584 = vperm.xlu0 %583, %v558
      %v585 = vpop.permute.xlu0 %584
      %588 = vset.pattern.permute.xlu0 0
      %589 = vperm.xlu0 %588, %v559
      %v590 = vpop.permute.xlu0 %589
      %593 = vset.pattern.permute.xlu0 0
      %594 = vperm.xlu0 %593, %v560
      %v595 = vpop.permute.xlu0 %594
      %598 = vset.pattern.permute.xlu0 0
      %599 = vperm.xlu0 %598, %v561
      %v600 = vpop.permute.xlu0 %599
      %603 = vset.pattern.permute.xlu0 0
      %604 = vperm.xlu0 %603, %v562
      %v605 = vpop.permute.xlu0 %604
      %608 = vset.pattern.permute.xlu0 0
      %609 = vperm.xlu0 %608, %v563
      %v610 = vpop.permute.xlu0 %609
      %613 = vset.pattern.permute.xlu0 0
      %614 = vperm.xlu0 %613, %v564
      %v615 = vpop.permute.xlu0 %614
      %618 = vset.pattern.permute.xlu0 0
      %619 = vperm.xlu0 %618, %v565
      %v620 = vpop.permute.xlu0 %619
      %623 = vset.pattern.permute.xlu0 0
      %624 = vperm.xlu0 %623, %v566
      %v625 = vpop.permute.xlu0 %624
      %628 = vset.pattern.permute.xlu0 0
      %629 = vperm.xlu0 %628, %v567
      %v630 = vpop.permute.xlu0 %629
      %633 = vset.pattern.permute.xlu0 0
      %634 = vperm.xlu0 %633, %v568
      %v635 = vpop.permute.xlu0 %634
      %638 = vset.pattern.permute.xlu0 0
      %639 = vperm.xlu0 %638, %v569
      %v640 = vpop.permute.xlu0 %639
      %643 = vset.pattern.permute.xlu0 0
      %644 = vperm.xlu0 %643, %v570
      %v645 = vpop.permute.xlu0 %644
      %648 = vset.pattern.permute.xlu0 0
      %649 = vperm.xlu0 %648, %v571
      %v650 = vpop.permute.xlu0 %649
      %v652 = vmul.f32 %v468, %v575
      %v653 = vmul.f32 %v517, %v575
      %v654 = vmul.f32 %v470, %v580
      %v655 = vmul.f32 %v519, %v580
      %v656 = vmul.f32 %v473, %v585
      %v657 = vmul.f32 %v522, %v585
      %v658 = vmul.f32 %v475, %v590
      %v659 = vmul.f32 %v524, %v590
      %v660 = vmul.f32 %v478, %v595
      %v661 = vmul.f32 %v527, %v595
      %v662 = vmul.f32 %v480, %v600
      %v663 = vmul.f32 %v529, %v600
      %v664 = vmul.f32 %v483, %v605
      %v665 = vmul.f32 %v532, %v605
      %v666 = vmul.f32 %v485, %v610
      %v667 = vmul.f32 %v534, %v610
      %v668 = vmul.f32 %v488, %v615
      %v669 = vmul.f32 %v537, %v615
      %v670 = vmul.f32 %v490, %v620
      %v671 = vmul.f32 %v539, %v620
      %v672 = vmul.f32 %v493, %v625
      %v673 = vmul.f32 %v542, %v625
      %v674 = vmul.f32 %v495, %v630
      %v675 = vmul.f32 %v544, %v630
      %v676 = vmul.f32 %v498, %v635
      %v677 = vmul.f32 %v547, %v635
      %v678 = vmul.f32 %v500, %v640
      %v679 = vmul.f32 %v549, %v640
      %v680 = vmul.f32 %v503, %v645
      %v681 = vmul.f32 %v552, %v645
      %v682 = vmul.f32 %v505, %v650
      %v683 = vmul.f32 %v554, %v650
      %v684 = vld [vmem:[#allocation2] sm:$0xff]
      %v685 = vld [vmem:[#allocation2 + $0x8] sm:$0xff]
      %v686 = vld [vmem:[#allocation2 + $0x10] sm:$0xff]
      %v687 = vld [vmem:[#allocation2 + $0x18] sm:$0xff]
      %v688 = vld [vmem:[#allocation2 + $0x20] sm:$0xff]
      %v689 = vld [vmem:[#allocation2 + $0x28] sm:$0xff]
      %v690 = vld [vmem:[#allocation2 + $0x30] sm:$0xff]
      %v691 = vld [vmem:[#allocation2 + $0x38] sm:$0xff]
      %v692 = vld [vmem:[#allocation2 + $0x40] sm:$0xff]
      %v693 = vld [vmem:[#allocation2 + $0x48] sm:$0xff]
      %v694 = vld [vmem:[#allocation2 + $0x50] sm:$0xff]
      %v695 = vld [vmem:[#allocation2 + $0x58] sm:$0xff]
      %v696 = vld [vmem:[#allocation2 + $0x60] sm:$0xff]
      %v697 = vld [vmem:[#allocation2 + $0x68] sm:$0xff]
      %v698 = vld [vmem:[#allocation2 + $0x70] sm:$0xff]
      %v699 = vld [vmem:[#allocation2 + $0x78] sm:$0xff]
      %v700 = vmax.f32 %v652, %v653
      %701 = vmax.xlane.f32.xlu0 %v700
      %v702 = vpop.xlane.xlu0 %701
      %v703 = vmax.f32 %v654, %v655
      %704 = vmax.xlane.f32.xlu0 %v703
      %v705 = vpop.xlane.xlu0 %704
      %v706 = vmax.f32 %v656, %v657
      %707 = vmax.xlane.f32.xlu0 %v706
      %v708 = vpop.xlane.xlu0 %707
      %v709 = vmax.f32 %v658, %v659
      %710 = vmax.xlane.f32.xlu0 %v709
      %v711 = vpop.xlane.xlu0 %710
      %v712 = vmax.f32 %v660, %v661
      %713 = vmax.xlane.f32.xlu0 %v712
      %v714 = vpop.xlane.xlu0 %713
      %v715 = vmax.f32 %v662, %v663
      %716 = vmax.xlane.f32.xlu0 %v715
      %v717 = vpop.xlane.xlu0 %716
      %v718 = vmax.f32 %v664, %v665
      %719 = vmax.xlane.f32.xlu0 %v718
      %v720 = vpop.xlane.xlu0 %719
      %v721 = vmax.f32 %v666, %v667
      %722 = vmax.xlane.f32.xlu0 %v721
      %v723 = vpop.xlane.xlu0 %722
      %v724 = vmax.f32 %v668, %v669
      %725 = vmax.xlane.f32.xlu0 %v724
      %v726 = vpop.xlane.xlu0 %725
      %v727 = vmax.f32 %v670, %v671
      %728 = vmax.xlane.f32.xlu0 %v727
      %v729 = vpop.xlane.xlu0 %728
      %v730 = vmax.f32 %v672, %v673
      %731 = vmax.xlane.f32.xlu0 %v730
      %v732 = vpop.xlane.xlu0 %731
      %v733 = vmax.f32 %v674, %v675
      %734 = vmax.xlane.f32.xlu0 %v733
      %v735 = vpop.xlane.xlu0 %734
      %v736 = vmax.f32 %v676, %v677
      %737 = vmax.xlane.f32.xlu0 %v736
      %v738 = vpop.xlane.xlu0 %737
      %v739 = vmax.f32 %v678, %v679
      %740 = vmax.xlane.f32.xlu0 %v739
      %v741 = vpop.xlane.xlu0 %740
      %v742 = vmax.f32 %v680, %v681
      %743 = vmax.xlane.f32.xlu0 %v742
      %v744 = vpop.xlane.xlu0 %743
      %v745 = vmax.f32 %v682, %v683
      %746 = vmax.xlane.f32.xlu0 %v745
      %v747 = vpop.xlane.xlu0 %746
      %v748 = vmax.f32 %v684, %v702
      %v749 = vmax.f32 %v685, %v705
      %v750 = vmax.f32 %v686, %v708
      %v751 = vmax.f32 %v687, %v711
      %v752 = vmax.f32 %v688, %v714
      %v753 = vmax.f32 %v689, %v717
      %v754 = vmax.f32 %v690, %v720
      %v755 = vmax.f32 %v691, %v723
      %v756 = vmax.f32 %v692, %v726
      %v757 = vmax.f32 %v693, %v729
      %v758 = vmax.f32 %v694, %v732
      %v759 = vmax.f32 %v695, %v735
      %v760 = vmax.f32 %v696, %v738
      %v761 = vmax.f32 %v697, %v741
      %v762 = vmax.f32 %v698, %v744
      %v763 = vmax.f32 %v699, %v747
      %v764 = vsub.f32 %v684, %v748
      %v765 = vsub.f32 %v685, %v749
      %v766 = vsub.f32 %v686, %v750
      %v767 = vsub.f32 %v687, %v751
      %v768 = vsub.f32 %v688, %v752
      %v769 = vsub.f32 %v689, %v753
      %v770 = vsub.f32 %v690, %v754
      %v771 = vsub.f32 %v691, %v755
      %v772 = vsub.f32 %v692, %v756
      %v773 = vsub.f32 %v693, %v757
      %v774 = vsub.f32 %v694, %v758
      %v775 = vsub.f32 %v695, %v759
      %v776 = vsub.f32 %v696, %v760
      %v777 = vsub.f32 %v697, %v761
      %v778 = vsub.f32 %v698, %v762
      %v779 = vsub.f32 %v699, %v763
      %v780 = vmul.f32 %v764, 1.442695
      %v781 = vpow.pop %v780
      %v782 = vmul.f32 %v765, 1.442695
      %v783 = vpow.pop %v782
      %v784 = vmul.f32 %v766, 1.442695
      %v785 = vpow.pop %v784
      %v786 = vmul.f32 %v767, 1.442695
      %v787 = vpow.pop %v786
      %v788 = vmul.f32 %v768, 1.442695
      %v789 = vpow.pop %v788
      %v790 = vmul.f32 %v769, 1.442695
      %v791 = vpow.pop %v790
      %v792 = vmul.f32 %v770, 1.442695
      %v793 = vpow.pop %v792
      %v794 = vmul.f32 %v771, 1.442695
      %v795 = vpow.pop %v794
      %v796 = vmul.f32 %v772, 1.442695
      %v797 = vpow.pop %v796
      %v798 = vmul.f32 %v773, 1.442695
      %v799 = vpow.pop %v798
      %v800 = vmul.f32 %v774, 1.442695
      %v801 = vpow.pop %v800
      %v802 = vmul.f32 %v775, 1.442695
      %v803 = vpow.pop %v802
      %v804 = vmul.f32 %v776, 1.442695
      %v805 = vpow.pop %v804
      %v806 = vmul.f32 %v777, 1.442695
      %v807 = vpow.pop %v806
      %v808 = vmul.f32 %v778, 1.442695
      %v809 = vpow.pop %v808
      %v810 = vmul.f32 %v779, 1.442695
      %v811 = vpow.pop %v810
      %813 = vset.pattern.permute.xlu0 0
      %814 = vperm.xlu0 %813, %v748
      %v815 = vpop.permute.xlu0 %814
      %818 = vset.pattern.permute.xlu0 0
      %819 = vperm.xlu0 %818, %v749
      %v820 = vpop.permute.xlu0 %819
      %823 = vset.pattern.permute.xlu0 0
      %824 = vperm.xlu0 %823, %v750
      %v825 = vpop.permute.xlu0 %824
      %828 = vset.pattern.permute.xlu0 0
      %829 = vperm.xlu0 %828, %v751
      %v830 = vpop.permute.xlu0 %829
      %833 = vset.pattern.permute.xlu0 0
      %834 = vperm.xlu0 %833, %v752
      %v835 = vpop.permute.xlu0 %834
      %838 = vset.pattern.permute.xlu0 0
      %839 = vperm.xlu0 %838, %v753
      %v840 = vpop.permute.xlu0 %839
      %843 = vset.pattern.permute.xlu0 0
      %844 = vperm.xlu0 %843, %v754
      %v845 = vpop.permute.xlu0 %844
      %848 = vset.pattern.permute.xlu0 0
      %849 = vperm.xlu0 %848, %v755
      %v850 = vpop.permute.xlu0 %849
      %853 = vset.pattern.permute.xlu0 0
      %854 = vperm.xlu0 %853, %v756
      %v855 = vpop.permute.xlu0 %854
      %858 = vset.pattern.permute.xlu0 0
      %859 = vperm.xlu0 %858, %v757
      %v860 = vpop.permute.xlu0 %859
      %863 = vset.pattern.permute.xlu0 0
      %864 = vperm.xlu0 %863, %v758
      %v865 = vpop.permute.xlu0 %864
      %868 = vset.pattern.permute.xlu0 0
      %869 = vperm.xlu0 %868, %v759
      %v870 = vpop.permute.xlu0 %869
      %873 = vset.pattern.permute.xlu0 0
      %874 = vperm.xlu0 %873, %v760
      %v875 = vpop.permute.xlu0 %874
      %878 = vset.pattern.permute.xlu0 0
      %879 = vperm.xlu0 %878, %v761
      %v880 = vpop.permute.xlu0 %879
      %883 = vset.pattern.permute.xlu0 0
      %884 = vperm.xlu0 %883, %v762
      %v885 = vpop.permute.xlu0 %884
      %888 = vset.pattern.permute.xlu0 0
      %889 = vperm.xlu0 %888, %v763
      %v890 = vpop.permute.xlu0 %889
      %v892 = vsub.f32 %v652, %v815
      %v893 = vsub.f32 %v653, %v815
      %v894 = vsub.f32 %v654, %v820
      %v895 = vsub.f32 %v655, %v820
      %v896 = vsub.f32 %v656, %v825
      %v897 = vsub.f32 %v657, %v825
      %v898 = vsub.f32 %v658, %v830
      %v899 = vsub.f32 %v659, %v830
      %v900 = vsub.f32 %v660, %v835
      %v901 = vsub.f32 %v661, %v835
      %v902 = vsub.f32 %v662, %v840
      %v903 = vsub.f32 %v663, %v840
      %v904 = vsub.f32 %v664, %v845
      %v905 = vsub.f32 %v665, %v845
      %v906 = vsub.f32 %v666, %v850
      %v907 = vsub.f32 %v667, %v850
      %v908 = vsub.f32 %v668, %v855
      %v909 = vsub.f32 %v669, %v855
      %v910 = vsub.f32 %v670, %v860
      %v911 = vsub.f32 %v671, %v860
      %v912 = vsub.f32 %v672, %v865
      %v913 = vsub.f32 %v673, %v865
      %v914 = vsub.f32 %v674, %v870
      %v915 = vsub.f32 %v675, %v870
      %v916 = vsub.f32 %v676, %v875
      %v917 = vsub.f32 %v677, %v875
      %v918 = vsub.f32 %v678, %v880
      %v919 = vsub.f32 %v679, %v880
      %v920 = vsub.f32 %v680, %v885
      %v921 = vsub.f32 %v681, %v885
      %v922 = vsub.f32 %v682, %v890
      %v923 = vsub.f32 %v683, %v890
      %v924 = vmul.f32 %v892, 1.442695
      %v925 = vpow.pop %v924
      %v926 = vmul.f32 %v893, 1.442695
      %v927 = vpow.pop %v926
      %v928 = vmul.f32 %v894, 1.442695
      %v929 = vpow.pop %v928
      %v930 = vmul.f32 %v895, 1.442695
      %v931 = vpow.pop %v930
      %v932 = vmul.f32 %v896, 1.442695
      %v933 = vpow.pop %v932
      %v934 = vmul.f32 %v897, 1.442695
      %v935 = vpow.pop %v934
      %v936 = vmul.f32 %v898, 1.442695
      %v937 = vpow.pop %v936
      %v938 = vmul.f32 %v899, 1.442695
      %v939 = vpow.pop %v938
      %v940 = vmul.f32 %v900, 1.442695
      %v941 = vpow.pop %v940
      %v942 = vmul.f32 %v901, 1.442695
      %v943 = vpow.pop %v942
      %v944 = vmul.f32 %v902, 1.442695
      %v945 = vpow.pop %v944
      %v946 = vmul.f32 %v903, 1.442695
      %v947 = vpow.pop %v946
      %v948 = vmul.f32 %v904, 1.442695
      %v949 = vpow.pop %v948
      %v950 = vmul.f32 %v905, 1.442695
      %v951 = vpow.pop %v950
      %v952 = vmul.f32 %v906, 1.442695
      %v953 = vpow.pop %v952
      %v954 = vmul.f32 %v907, 1.442695
      %v955 = vpow.pop %v954
      %v956 = vmul.f32 %v908, 1.442695
      %v957 = vpow.pop %v956
      %v958 = vmul.f32 %v909, 1.442695
      %v959 = vpow.pop %v958
      %v960 = vmul.f32 %v910, 1.442695
      %v961 = vpow.pop %v960
      %v962 = vmul.f32 %v911, 1.442695
      %v963 = vpow.pop %v962
      %v964 = vmul.f32 %v912, 1.442695
      %v965 = vpow.pop %v964
      %v966 = vmul.f32 %v913, 1.442695
      %v967 = vpow.pop %v966
      %v968 = vmul.f32 %v914, 1.442695
      %v969 = vpow.pop %v968
      %v970 = vmul.f32 %v915, 1.442695
      %v971 = vpow.pop %v970
      %v972 = vmul.f32 %v916, 1.442695
      %v973 = vpow.pop %v972
      %v974 = vmul.f32 %v917, 1.442695
      %v975 = vpow.pop %v974
      %v976 = vmul.f32 %v918, 1.442695
      %v977 = vpow.pop %v976
      %v978 = vmul.f32 %v919, 1.442695
      %v979 = vpow.pop %v978
      %v980 = vmul.f32 %v920, 1.442695
      %v981 = vpow.pop %v980
      %v982 = vmul.f32 %v921, 1.442695
      %v983 = vpow.pop %v982
      %v984 = vmul.f32 %v922, 1.442695
      %v985 = vpow.pop %v984
      %v986 = vmul.f32 %v923, 1.442695
      %v987 = vpow.pop %v986
      %v988 = vld [vmem:[#allocation3] sm:$0xff]
      %v989 = vld [vmem:[#allocation3 + $0x8] sm:$0xff]
      %v990 = vld [vmem:[#allocation3 + $0x10] sm:$0xff]
      %v991 = vld [vmem:[#allocation3 + $0x18] sm:$0xff]
      %v992 = vld [vmem:[#allocation3 + $0x20] sm:$0xff]
      %v993 = vld [vmem:[#allocation3 + $0x28] sm:$0xff]
      %v994 = vld [vmem:[#allocation3 + $0x30] sm:$0xff]
      %v995 = vld [vmem:[#allocation3 + $0x38] sm:$0xff]
      %v996 = vld [vmem:[#allocation3 + $0x40] sm:$0xff]
      %v997 = vld [vmem:[#allocation3 + $0x48] sm:$0xff]
      %v998 = vld [vmem:[#allocation3 + $0x50] sm:$0xff]
      %v999 = vld [vmem:[#allocation3 + $0x58] sm:$0xff]
      %v1000 = vld [vmem:[#allocation3 + $0x60] sm:$0xff]
      %v1001 = vld [vmem:[#allocation3 + $0x68] sm:$0xff]
      %v1002 = vld [vmem:[#allocation3 + $0x70] sm:$0xff]
      %v1003 = vld [vmem:[#allocation3 + $0x78] sm:$0xff]
      %v1004 = vmul.f32 %v781, %v988
      %v1005 = vmul.f32 %v783, %v989
      %v1006 = vmul.f32 %v785, %v990
      %v1007 = vmul.f32 %v787, %v991
      %v1008 = vmul.f32 %v789, %v992
      %v1009 = vmul.f32 %v791, %v993
      %v1010 = vmul.f32 %v793, %v994
      %v1011 = vmul.f32 %v795, %v995
      %v1012 = vmul.f32 %v797, %v996
      %v1013 = vmul.f32 %v799, %v997
      %v1014 = vmul.f32 %v801, %v998
      %v1015 = vmul.f32 %v803, %v999
      %v1016 = vmul.f32 %v805, %v1000
      %v1017 = vmul.f32 %v807, %v1001
      %v1018 = vmul.f32 %v809, %v1002
      %v1019 = vmul.f32 %v811, %v1003
      %v1020 = vadd.f32 %v925, %v927
      %1021 = vadd.xlane.f32.xlu0 %v1020
      %v1022 = vpop.xlane.xlu0 %1021
      %v1023 = vadd.f32 %v929, %v931
      %1024 = vadd.xlane.f32.xlu0 %v1023
      %v1025 = vpop.xlane.xlu0 %1024
      %v1026 = vadd.f32 %v933, %v935
      %1027 = vadd.xlane.f32.xlu0 %v1026
      %v1028 = vpop.xlane.xlu0 %1027
      %v1029 = vadd.f32 %v937, %v939
      %1030 = vadd.xlane.f32.xlu0 %v1029
      %v1031 = vpop.xlane.xlu0 %1030
      %v1032 = vadd.f32 %v941, %v943
      %1033 = vadd.xlane.f32.xlu0 %v1032
      %v1034 = vpop.xlane.xlu0 %1033
      %v1035 = vadd.f32 %v945, %v947
      %1036 = vadd.xlane.f32.xlu0 %v1035
      %v1037 = vpop.xlane.xlu0 %1036
      %v1038 = vadd.f32 %v949, %v951
      %1039 = vadd.xlane.f32.xlu0 %v1038
      %v1040 = vpop.xlane.xlu0 %1039
      %v1041 = vadd.f32 %v953, %v955
      %1042 = vadd.xlane.f32.xlu0 %v1041
      %v1043 = vpop.xlane.xlu0 %1042
      %v1044 = vadd.f32 %v957, %v959
      %1045 = vadd.xlane.f32.xlu0 %v1044
      %v1046 = vpop.xlane.xlu0 %1045
      %v1047 = vadd.f32 %v961, %v963
      %1048 = vadd.xlane.f32.xlu0 %v1047
      %v1049 = vpop.xlane.xlu0 %1048
      %v1050 = vadd.f32 %v965, %v967
      %1051 = vadd.xlane.f32.xlu0 %v1050
      %v1052 = vpop.xlane.xlu0 %1051
      %v1053 = vadd.f32 %v969, %v971
      %1054 = vadd.xlane.f32.xlu0 %v1053
      %v1055 = vpop.xlane.xlu0 %1054
      %v1056 = vadd.f32 %v973, %v975
      %1057 = vadd.xlane.f32.xlu0 %v1056
      %v1058 = vpop.xlane.xlu0 %1057
      %v1059 = vadd.f32 %v977, %v979
      %1060 = vadd.xlane.f32.xlu0 %v1059
      %v1061 = vpop.xlane.xlu0 %1060
      %v1062 = vadd.f32 %v981, %v983
      %1063 = vadd.xlane.f32.xlu0 %v1062
      %v1064 = vpop.xlane.xlu0 %1063
      %v1065 = vadd.f32 %v985, %v987
      %1066 = vadd.xlane.f32.xlu0 %v1065
      %v1067 = vpop.xlane.xlu0 %1066
      %v1068 = vadd.f32 %v1004, %v1022
      %v1069 = vadd.f32 %v1005, %v1025
      %v1070 = vadd.f32 %v1006, %v1028
      %v1071 = vadd.f32 %v1007, %v1031
      %v1072 = vadd.f32 %v1008, %v1034
      %v1073 = vadd.f32 %v1009, %v1037
      %v1074 = vadd.f32 %v1010, %v1040
      %v1075 = vadd.f32 %v1011, %v1043
      %v1076 = vadd.f32 %v1012, %v1046
      %v1077 = vadd.f32 %v1013, %v1049
      %v1078 = vadd.f32 %v1014, %v1052
      %v1079 = vadd.f32 %v1015, %v1055
      %v1080 = vadd.f32 %v1016, %v1058
      %v1081 = vadd.f32 %v1017, %v1061
      %v1082 = vadd.f32 %v1018, %v1064
      %v1083 = vadd.f32 %v1019, %v1067
      %vm1084 = vcmask 7168
      %1085 = vst.msk [vmem:[#allocation3] sm:$0xff] %vm1084, %v1068
      %1086 = vst.msk [vmem:[#allocation3 + $0x8] sm:$0xff] %vm1084, %v1069
      %1087 = vst.msk [vmem:[#allocation3 + $0x10] sm:$0xff] %vm1084, %v1070
      %1088 = vst.msk [vmem:[#allocation3 + $0x18] sm:$0xff] %vm1084, %v1071
      %1089 = vst.msk [vmem:[#allocation3 + $0x20] sm:$0xff] %vm1084, %v1072
      %1090 = vst.msk [vmem:[#allocation3 + $0x28] sm:$0xff] %vm1084, %v1073
      %1091 = vst.msk [vmem:[#allocation3 + $0x30] sm:$0xff] %vm1084, %v1074
      %1092 = vst.msk [vmem:[#allocation3 + $0x38] sm:$0xff] %vm1084, %v1075
      %1093 = vst.msk [vmem:[#allocation3 + $0x40] sm:$0xff] %vm1084, %v1076
      %1094 = vst.msk [vmem:[#allocation3 + $0x48] sm:$0xff] %vm1084, %v1077
      %1095 = vst.msk [vmem:[#allocation3 + $0x50] sm:$0xff] %vm1084, %v1078
      %1096 = vst.msk [vmem:[#allocation3 + $0x58] sm:$0xff] %vm1084, %v1079
      %1097 = vst.msk [vmem:[#allocation3 + $0x60] sm:$0xff] %vm1084, %v1080
      %1098 = vst.msk [vmem:[#allocation3 + $0x68] sm:$0xff] %vm1084, %v1081
      %1099 = vst.msk [vmem:[#allocation3 + $0x70] sm:$0xff] %vm1084, %v1082
      %1100 = vst.msk [vmem:[#allocation3 + $0x78] sm:$0xff] %vm1084, %v1083
      %v1101 = vld [vmem:[#allocation4] sm:$0xff]
      %v1102 = vld [vmem:[#allocation4 + $0x8] sm:$0xff]
      %v1103 = vld [vmem:[#allocation4 + $0x10] sm:$0xff]
      %v1104 = vld [vmem:[#allocation4 + $0x18] sm:$0xff]
      %v1105 = vld [vmem:[#allocation4 + $0x20] sm:$0xff]
      %v1106 = vld [vmem:[#allocation4 + $0x28] sm:$0xff]
      %v1107 = vld [vmem:[#allocation4 + $0x30] sm:$0xff]
      %v1108 = vld [vmem:[#allocation4 + $0x38] sm:$0xff]
      %v1109 = vld [vmem:[#allocation4 + $0x40] sm:$0xff]
      %v1110 = vld [vmem:[#allocation4 + $0x48] sm:$0xff]
      %v1111 = vld [vmem:[#allocation4 + $0x50] sm:$0xff]
      %v1112 = vld [vmem:[#allocation4 + $0x58] sm:$0xff]
      %v1113 = vld [vmem:[#allocation4 + $0x60] sm:$0xff]
      %v1114 = vld [vmem:[#allocation4 + $0x68] sm:$0xff]
      %v1115 = vld [vmem:[#allocation4 + $0x70] sm:$0xff]
      %v1116 = vld [vmem:[#allocation4 + $0x78] sm:$0xff]
      %1118 = vset.pattern.permute.xlu0 0
      %1119 = vperm.xlu0 %1118, %v781
      %v1120 = vpop.permute.xlu0 %1119
      %1123 = vset.pattern.permute.xlu0 0
      %1124 = vperm.xlu0 %1123, %v783
      %v1125 = vpop.permute.xlu0 %1124
      %1128 = vset.pattern.permute.xlu0 0
      %1129 = vperm.xlu0 %1128, %v785
      %v1130 = vpop.permute.xlu0 %1129
      %1133 = vset.pattern.permute.xlu0 0
      %1134 = vperm.xlu0 %1133, %v787
      %v1135 = vpop.permute.xlu0 %1134
      %1138 = vset.pattern.permute.xlu0 0
      %1139 = vperm.xlu0 %1138, %v789
      %v1140 = vpop.permute.xlu0 %1139
      %1143 = vset.pattern.permute.xlu0 0
      %1144 = vperm.xlu0 %1143, %v791
      %v1145 = vpop.permute.xlu0 %1144
      %1148 = vset.pattern.permute.xlu0 0
      %1149 = vperm.xlu0 %1148, %v793
      %v1150 = vpop.permute.xlu0 %1149
      %1153 = vset.pattern.permute.xlu0 0
      %1154 = vperm.xlu0 %1153, %v795
      %v1155 = vpop.permute.xlu0 %1154
      %1158 = vset.pattern.permute.xlu0 0
      %1159 = vperm.xlu0 %1158, %v797
      %v1160 = vpop.permute.xlu0 %1159
      %1163 = vset.pattern.permute.xlu0 0
      %1164 = vperm.xlu0 %1163, %v799
      %v1165 = vpop.permute.xlu0 %1164
      %1168 = vset.pattern.permute.xlu0 0
      %1169 = vperm.xlu0 %1168, %v801
      %v1170 = vpop.permute.xlu0 %1169
      %1173 = vset.pattern.permute.xlu0 0
      %1174 = vperm.xlu0 %1173, %v803
      %v1175 = vpop.permute.xlu0 %1174
      %1178 = vset.pattern.permute.xlu0 0
      %1179 = vperm.xlu0 %1178, %v805
      %v1180 = vpop.permute.xlu0 %1179
      %1183 = vset.pattern.permute.xlu0 0
      %1184 = vperm.xlu0 %1183, %v807
      %v1185 = vpop.permute.xlu0 %1184
      %1188 = vset.pattern.permute.xlu0 0
      %1189 = vperm.xlu0 %1188, %v809
      %v1190 = vpop.permute.xlu0 %1189
      %1193 = vset.pattern.permute.xlu0 0
      %1194 = vperm.xlu0 %1193, %v811
      %v1195 = vpop.permute.xlu0 %1194
      %v1197 = vmul.f32 %v1120, %v1101
      %v1198 = vmul.f32 %v1125, %v1102
      %v1199 = vmul.f32 %v1130, %v1103
      %v1200 = vmul.f32 %v1135, %v1104
      %v1201 = vmul.f32 %v1140, %v1105
      %v1202 = vmul.f32 %v1145, %v1106
      %v1203 = vmul.f32 %v1150, %v1107
      %v1204 = vmul.f32 %v1155, %v1108
      %v1205 = vmul.f32 %v1160, %v1109
      %v1206 = vmul.f32 %v1165, %v1110
      %v1207 = vmul.f32 %v1170, %v1111
      %v1208 = vmul.f32 %v1175, %v1112
      %v1209 = vmul.f32 %v1180, %v1113
      %v1210 = vmul.f32 %v1185, %v1114
      %v1211 = vmul.f32 %v1190, %v1115
      %v1212 = vmul.f32 %v1195, %v1116
      %v1213 = vpack.c.bf16 %v929, %v925
      %v1214 = vpack.c.bf16 %v931, %v927
      %v1215 = vpack.c.bf16 %v937, %v933
      %v1216 = vpack.c.bf16 %v939, %v935
      %v1217 = vpack.c.bf16 %v945, %v941
      %v1218 = vpack.c.bf16 %v947, %v943
      %v1219 = vpack.c.bf16 %v953, %v949
      %v1220 = vpack.c.bf16 %v955, %v951
      %v1221 = vpack.c.bf16 %v961, %v957
      %v1222 = vpack.c.bf16 %v963, %v959
      %v1223 = vpack.c.bf16 %v969, %v965
      %v1224 = vpack.c.bf16 %v971, %v967
      %v1225 = vpack.c.bf16 %v977, %v973
      %v1226 = vpack.c.bf16 %v979, %v975
      %v1227 = vpack.c.bf16 %v985, %v981
      %v1228 = vpack.c.bf16 %v987, %v983
      %v1229 = vld [vmem:[%s295] sm:$0xf]
      %v1230 = vld [vmem:[%s295 + $0x4] sm:$0xf]
      %v1231 = vld [vmem:[%s295 + $0x8] sm:$0xf]
      %v1232 = vld [vmem:[%s295 + $0xc] sm:$0xf]
      %v1233 = vld [vmem:[%s295 + $0x10] sm:$0xf]
      %v1234 = vld [vmem:[%s295 + $0x14] sm:$0xf]
      %v1235 = vld [vmem:[%s295 + $0x18] sm:$0xf]
      %v1236 = vld [vmem:[%s295 + $0x1c] sm:$0xf]
      %v1237 = vld [vmem:[%s295 + $0x20] sm:$0xf]
      %v1238 = vld [vmem:[%s295 + $0x24] sm:$0xf]
      %v1239 = vld [vmem:[%s295 + $0x28] sm:$0xf]
      %v1240 = vld [vmem:[%s295 + $0x2c] sm:$0xf]
      %v1241 = vld [vmem:[%s295 + $0x30] sm:$0xf]
      %v1242 = vld [vmem:[%s295 + $0x34] sm:$0xf]
      %v1243 = vld [vmem:[%s295 + $0x38] sm:$0xf]
      %v1244 = vld [vmem:[%s295 + $0x3c] sm:$0xf]
      %v1245 = vld [vmem:[%s295 + $0x40] sm:$0xf]
      %v1246 = vld [vmem:[%s295 + $0x44] sm:$0xf]
      %v1247 = vld [vmem:[%s295 + $0x48] sm:$0xf]
      %v1248 = vld [vmem:[%s295 + $0x4c] sm:$0xf]
      %v1249 = vld [vmem:[%s295 + $0x50] sm:$0xf]
      %v1250 = vld [vmem:[%s295 + $0x54] sm:$0xf]
      %v1251 = vld [vmem:[%s295 + $0x58] sm:$0xf]
      %v1252 = vld [vmem:[%s295 + $0x5c] sm:$0xf]
      %v1253 = vld [vmem:[%s295 + $0x60] sm:$0xf]
      %v1254 = vld [vmem:[%s295 + $0x64] sm:$0xf]
      %v1255 = vld [vmem:[%s295 + $0x68] sm:$0xf]
      %v1256 = vld [vmem:[%s295 + $0x6c] sm:$0xf]
      %v1257 = vld [vmem:[%s295 + $0x70] sm:$0xf]
      %v1258 = vld [vmem:[%s295 + $0x74] sm:$0xf]
      %v1259 = vld [vmem:[%s295 + $0x78] sm:$0xf]
      %v1260 = vld [vmem:[%s295 + $0x7c] sm:$0xf]
      %v1293 = vunpack.c.l.b16 %v1229
      %v1294 = vunpack.c.l.b16 %v1230
      %v1295 = vunpack.c.l.b16 %v1231
      %v1296 = vunpack.c.l.b16 %v1232
      %v1297 = vunpack.c.l.b16 %v1233
      %v1298 = vunpack.c.l.b16 %v1234
      %v1299 = vunpack.c.l.b16 %v1235
      %v1300 = vunpack.c.l.b16 %v1236
      %v1301 = vunpack.c.l.b16 %v1237
      %v1302 = vunpack.c.l.b16 %v1238
      %v1303 = vunpack.c.l.b16 %v1239
      %v1304 = vunpack.c.l.b16 %v1240
      %v1305 = vunpack.c.l.b16 %v1241
      %v1306 = vunpack.c.l.b16 %v1242
      %v1307 = vunpack.c.l.b16 %v1243
      %v1308 = vunpack.c.l.b16 %v1244
      %v1309 = vunpack.c.l.b16 %v1245
      %v1310 = vunpack.c.l.b16 %v1246
      %v1311 = vunpack.c.l.b16 %v1247
      %v1312 = vunpack.c.l.b16 %v1248
      %v1313 = vunpack.c.l.b16 %v1249
      %v1314 = vunpack.c.l.b16 %v1250
      %v1315 = vunpack.c.l.b16 %v1251
      %v1316 = vunpack.c.l.b16 %v1252
      %v1317 = vunpack.c.l.b16 %v1253
      %v1318 = vunpack.c.l.b16 %v1254
      %v1319 = vunpack.c.l.b16 %v1255
      %v1320 = vunpack.c.l.b16 %v1256
      %v1321 = vunpack.c.l.b16 %v1257
      %v1322 = vunpack.c.l.b16 %v1258
      %v1323 = vunpack.c.l.b16 %v1259
      %v1324 = vunpack.c.l.b16 %v1260
      %v1325 = vpack.c.b16 %v1294, %v1293
      %v1326 = vpack.c.b16 %v1296, %v1295
      %v1327 = vpack.c.b16 %v1298, %v1297
      %v1328 = vpack.c.b16 %v1300, %v1299
      %v1329 = vpack.c.b16 %v1302, %v1301
      %v1330 = vpack.c.b16 %v1304, %v1303
      %v1331 = vpack.c.b16 %v1306, %v1305
      %v1332 = vpack.c.b16 %v1308, %v1307
      %v1333 = vpack.c.b16 %v1310, %v1309
      %v1334 = vpack.c.b16 %v1312, %v1311
      %v1335 = vpack.c.b16 %v1314, %v1313
      %v1336 = vpack.c.b16 %v1316, %v1315
      %v1337 = vpack.c.b16 %v1318, %v1317
      %v1338 = vpack.c.b16 %v1320, %v1319
      %v1339 = vpack.c.b16 %v1322, %v1321
      %v1340 = vpack.c.b16 %v1324, %v1323
      %1357 = vmatpush.bf16.msra.mxu0 %v1332
      %1358 = vmatpush.bf16.msra.mxu0 %v1331
      %1359 = vmatpush.bf16.msra.mxu0 %v1330
      %1360 = vmatpush.bf16.msra.mxu0 %v1329
      %1361 = vmatpush.bf16.msra.mxu0 %v1328
      %1362 = vmatpush.bf16.msra.mxu0 %v1327
      %1363 = vmatpush.bf16.msra.mxu0 %v1326
      %1364 = vmatpush.bf16.msra.mxu0 %v1325
      %1365 = vmatmul.bf16.gmra.mxu0 %v1213
      %v1366 = vpop.f32.mrf.mxu0
      %v1367 = vadd.f32 0.0, %v1366
      %v1368 = vpop.f32.mrf.mxu0
      %v1369 = vadd.f32 0.0, %v1368
      %1370 = vmatmul.bf16.gmra.mxu0 %v1215
      %v1371 = vpop.f32.mrf.mxu0
      %v1372 = vadd.f32 0.0, %v1371
      %v1373 = vpop.f32.mrf.mxu0
      %v1374 = vadd.f32 0.0, %v1373
      %1375 = vmatmul.bf16.gmra.mxu0 %v1217
      %v1376 = vpop.f32.mrf.mxu0
      %v1377 = vadd.f32 0.0, %v1376
      %v1378 = vpop.f32.mrf.mxu0
      %v1379 = vadd.f32 0.0, %v1378
      %1380 = vmatmul.bf16.gmra.mxu0 %v1219
      %v1381 = vpop.f32.mrf.mxu0
      %v1382 = vadd.f32 0.0, %v1381
      %v1383 = vpop.f32.mrf.mxu0
      %v1384 = vadd.f32 0.0, %v1383
      %1385 = vmatmul.bf16.gmra.mxu0 %v1221
      %v1386 = vpop.f32.mrf.mxu0
      %v1387 = vadd.f32 0.0, %v1386
      %v1388 = vpop.f32.mrf.mxu0
      %v1389 = vadd.f32 0.0, %v1388
      %1390 = vmatmul.bf16.gmra.mxu0 %v1223
      %v1391 = vpop.f32.mrf.mxu0
      %v1392 = vadd.f32 0.0, %v1391
      %v1393 = vpop.f32.mrf.mxu0
      %v1394 = vadd.f32 0.0, %v1393
      %1395 = vmatmul.bf16.gmra.mxu0 %v1225
      %v1396 = vpop.f32.mrf.mxu0
      %v1397 = vadd.f32 0.0, %v1396
      %v1398 = vpop.f32.mrf.mxu0
      %v1399 = vadd.f32 0.0, %v1398
      %1400 = vmatmul.bf16.gmra.mxu0 %v1227
      %v1401 = vpop.f32.mrf.mxu0
      %v1402 = vadd.f32 0.0, %v1401
      %v1403 = vpop.f32.mrf.mxu0
      %v1404 = vadd.f32 0.0, %v1403
      %1405 = vdwg.mxu0
      %1406 = vmatpush.bf16.msra.mxu0 %v1340
      %1407 = vmatpush.bf16.msra.mxu0 %v1339
      %1408 = vmatpush.bf16.msra.mxu0 %v1338
      %1409 = vmatpush.bf16.msra.mxu0 %v1337
      %1410 = vmatpush.bf16.msra.mxu0 %v1336
      %1411 = vmatpush.bf16.msra.mxu0 %v1335
      %1412 = vmatpush.bf16.msra.mxu0 %v1334
      %1413 = vmatpush.bf16.msra.mxu0 %v1333
      %1414 = vmatmul.bf16.gmra.mxu0 %v1214
      %v1415 = vpop.f32.mrf.mxu0
      %v1416 = vadd.f32 %v1367, %v1415
      %v1417 = vpop.f32.mrf.mxu0
      %v1418 = vadd.f32 %v1369, %v1417
      %1419 = vmatmul.bf16.gmra.mxu0 %v1216
      %v1420 = vpop.f32.mrf.mxu0
      %v1421 = vadd.f32 %v1372, %v1420
      %v1422 = vpop.f32.mrf.mxu0
      %v1423 = vadd.f32 %v1374, %v1422
      %1424 = vmatmul.bf16.gmra.mxu0 %v1218
      %v1425 = vpop.f32.mrf.mxu0
      %v1426 = vadd.f32 %v1377, %v1425
      %v1427 = vpop.f32.mrf.mxu0
      %v1428 = vadd.f32 %v1379, %v1427
      %1429 = vmatmul.bf16.gmra.mxu0 %v1220
      %v1430 = vpop.f32.mrf.mxu0
      %v1431 = vadd.f32 %v1382, %v1430
      %v1432 = vpop.f32.mrf.mxu0
      %v1433 = vadd.f32 %v1384, %v1432
      %1434 = vmatmul.bf16.gmra.mxu0 %v1222
      %v1435 = vpop.f32.mrf.mxu0
      %v1436 = vadd.f32 %v1387, %v1435
      %v1437 = vpop.f32.mrf.mxu0
      %v1438 = vadd.f32 %v1389, %v1437
      %1439 = vmatmul.bf16.gmra.mxu0 %v1224
      %v1440 = vpop.f32.mrf.mxu0
      %v1441 = vadd.f32 %v1392, %v1440
      %v1442 = vpop.f32.mrf.mxu0
      %v1443 = vadd.f32 %v1394, %v1442
      %1444 = vmatmul.bf16.gmra.mxu0 %v1226
      %v1445 = vpop.f32.mrf.mxu0
      %v1446 = vadd.f32 %v1397, %v1445
      %v1447 = vpop.f32.mrf.mxu0
      %v1448 = vadd.f32 %v1399, %v1447
      %1449 = vmatmul.bf16.gmra.mxu0 %v1228
      %v1450 = vpop.f32.mrf.mxu0
      %v1451 = vadd.f32 %v1402, %v1450
      %v1452 = vpop.f32.mrf.mxu0
      %v1453 = vadd.f32 %v1404, %v1452
      %1454 = vdwg.mxu0
      %v1455 = vadd.f32 %v1197, %v1416
      %v1456 = vadd.f32 %v1198, %v1418
      %v1457 = vadd.f32 %v1199, %v1421
      %v1458 = vadd.f32 %v1200, %v1423
      %v1459 = vadd.f32 %v1201, %v1426
      %v1460 = vadd.f32 %v1202, %v1428
      %v1461 = vadd.f32 %v1203, %v1431
      %v1462 = vadd.f32 %v1204, %v1433
      %v1463 = vadd.f32 %v1205, %v1436
      %v1464 = vadd.f32 %v1206, %v1438
      %v1465 = vadd.f32 %v1207, %v1441
      %v1466 = vadd.f32 %v1208, %v1443
      %v1467 = vadd.f32 %v1209, %v1446
      %v1468 = vadd.f32 %v1210, %v1448
      %v1469 = vadd.f32 %v1211, %v1451
      %v1470 = vadd.f32 %v1212, %v1453
      %1471 = vst.msk [vmem:[#allocation4] sm:$0xff] %vm426, %v1455
      %1472 = vst.msk [vmem:[#allocation4 + $0x8] sm:$0xff] %vm426, %v1456
      %1473 = vst.msk [vmem:[#allocation4 + $0x10] sm:$0xff] %vm426, %v1457
      %1474 = vst.msk [vmem:[#allocation4 + $0x18] sm:$0xff] %vm426, %v1458
      %1475 = vst.msk [vmem:[#allocation4 + $0x20] sm:$0xff] %vm426, %v1459
      %1476 = vst.msk [vmem:[#allocation4 + $0x28] sm:$0xff] %vm426, %v1460
      %1477 = vst.msk [vmem:[#allocation4 + $0x30] sm:$0xff] %vm426, %v1461
      %1478 = vst.msk [vmem:[#allocation4 + $0x38] sm:$0xff] %vm426, %v1462
      %1479 = vst.msk [vmem:[#allocation4 + $0x40] sm:$0xff] %vm426, %v1463
      %1480 = vst.msk [vmem:[#allocation4 + $0x48] sm:$0xff] %vm426, %v1464
      %1481 = vst.msk [vmem:[#allocation4 + $0x50] sm:$0xff] %vm426, %v1465
      %1482 = vst.msk [vmem:[#allocation4 + $0x58] sm:$0xff] %vm426, %v1466
      %1483 = vst.msk [vmem:[#allocation4 + $0x60] sm:$0xff] %vm426, %v1467
      %1484 = vst.msk [vmem:[#allocation4 + $0x68] sm:$0xff] %vm426, %v1468
      %1485 = vst.msk [vmem:[#allocation4 + $0x70] sm:$0xff] %vm426, %v1469
      %1486 = vst.msk [vmem:[#allocation4 + $0x78] sm:$0xff] %vm426, %v1470
      %1487 = vst.msk [vmem:[#allocation2] sm:$0xff] %vm1084, %v748
      %1488 = vst.msk [vmem:[#allocation2 + $0x8] sm:$0xff] %vm1084, %v749
      %1489 = vst.msk [vmem:[#allocation2 + $0x10] sm:$0xff] %vm1084, %v750
      %1490 = vst.msk [vmem:[#allocation2 + $0x18] sm:$0xff] %vm1084, %v751
      %1491 = vst.msk [vmem:[#allocation2 + $0x20] sm:$0xff] %vm1084, %v752
      %1492 = vst.msk [vmem:[#allocation2 + $0x28] sm:$0xff] %vm1084, %v753
      %1493 = vst.msk [vmem:[#allocation2 + $0x30] sm:$0xff] %vm1084, %v754
      %1494 = vst.msk [vmem:[#allocation2 + $0x38] sm:$0xff] %vm1084, %v755
      %1495 = vst.msk [vmem:[#allocation2 + $0x40] sm:$0xff] %vm1084, %v756
      %1496 = vst.msk [vmem:[#allocation2 + $0x48] sm:$0xff] %vm1084, %v757
      %1497 = vst.msk [vmem:[#allocation2 + $0x50] sm:$0xff] %vm1084, %v758
      %1498 = vst.msk [vmem:[#allocation2 + $0x58] sm:$0xff] %vm1084, %v759
      %1499 = vst.msk [vmem:[#allocation2 + $0x60] sm:$0xff] %vm1084, %v760
      %1500 = vst.msk [vmem:[#allocation2 + $0x68] sm:$0xff] %vm1084, %v761
      %1501 = vst.msk [vmem:[#allocation2 + $0x70] sm:$0xff] %vm1084, %v762
      %1502 = vst.msk [vmem:[#allocation2 + $0x78] sm:$0xff] %vm1084, %v763
      %p1503 = scmp.eq.s32.totalorder %s21, 1
      // Predicated region
      $region45: #{tpu_custom_call.1} parent=39 // pred_check
        %p1504 = pneg %p1503
      $region46: #{tpu_custom_call.1} parent=39 // pred_check_branch
        %1506 = sbr.rel (%p1504) target = $region48
      $region47: #{tpu_custom_call.1} parent=39 // pred_region
        %v1507 = vld [vmem:[#allocation3] sm:$0xff]
        %v1508 = vld [vmem:[#allocation3 + $0x8] sm:$0xff]
        %v1509 = vld [vmem:[#allocation3 + $0x10] sm:$0xff]
        %v1510 = vld [vmem:[#allocation3 + $0x18] sm:$0xff]
        %v1511 = vld [vmem:[#allocation3 + $0x20] sm:$0xff]
        %v1512 = vld [vmem:[#allocation3 + $0x28] sm:$0xff]
        %v1513 = vld [vmem:[#allocation3 + $0x30] sm:$0xff]
        %v1514 = vld [vmem:[#allocation3 + $0x38] sm:$0xff]
        %v1515 = vld [vmem:[#allocation3 + $0x40] sm:$0xff]
        %v1516 = vld [vmem:[#allocation3 + $0x48] sm:$0xff]
        %v1517 = vld [vmem:[#allocation3 + $0x50] sm:$0xff]
        %v1518 = vld [vmem:[#allocation3 + $0x58] sm:$0xff]
        %v1519 = vld [vmem:[#allocation3 + $0x60] sm:$0xff]
        %v1520 = vld [vmem:[#allocation3 + $0x68] sm:$0xff]
        %v1521 = vld [vmem:[#allocation3 + $0x70] sm:$0xff]
        %v1522 = vld [vmem:[#allocation3 + $0x78] sm:$0xff]
        %v1523 = vrcp.pop %v1507
        %v1524 = vrcp.pop %v1508
        %v1525 = vrcp.pop %v1509
        %v1526 = vrcp.pop %v1510
        %v1527 = vrcp.pop %v1511
        %v1528 = vrcp.pop %v1512
        %v1529 = vrcp.pop %v1513
        %v1530 = vrcp.pop %v1514
        %v1531 = vrcp.pop %v1515
        %v1532 = vrcp.pop %v1516
        %v1533 = vrcp.pop %v1517
        %v1534 = vrcp.pop %v1518
        %v1535 = vrcp.pop %v1519
        %v1536 = vrcp.pop %v1520
        %v1537 = vrcp.pop %v1521
        %v1538 = vrcp.pop %v1522
        %v1539 = vld [vmem:[#allocation4] sm:$0xff]
        %v1540 = vld [vmem:[#allocation4 + $0x8] sm:$0xff]
        %v1541 = vld [vmem:[#allocation4 + $0x10] sm:$0xff]
        %v1542 = vld [vmem:[#allocation4 + $0x18] sm:$0xff]
        %v1543 = vld [vmem:[#allocation4 + $0x20] sm:$0xff]
        %v1544 = vld [vmem:[#allocation4 + $0x28] sm:$0xff]
        %v1545 = vld [vmem:[#allocation4 + $0x30] sm:$0xff]
        %v1546 = vld [vmem:[#allocation4 + $0x38] sm:$0xff]
        %v1547 = vld [vmem:[#allocation4 + $0x40] sm:$0xff]
        %v1548 = vld [vmem:[#allocation4 + $0x48] sm:$0xff]
        %v1549 = vld [vmem:[#allocation4 + $0x50] sm:$0xff]
        %v1550 = vld [vmem:[#allocation4 + $0x58] sm:$0xff]
        %v1551 = vld [vmem:[#allocation4 + $0x60] sm:$0xff]
        %v1552 = vld [vmem:[#allocation4 + $0x68] sm:$0xff]
        %v1553 = vld [vmem:[#allocation4 + $0x70] sm:$0xff]
        %v1554 = vld [vmem:[#allocation4 + $0x78] sm:$0xff]
        %1556 = vset.pattern.permute.xlu0 0
        %1557 = vperm.xlu0 %1556, %v1523
        %v1558 = vpop.permute.xlu0 %1557
        %1561 = vset.pattern.permute.xlu0 0
        %1562 = vperm.xlu0 %1561, %v1524
        %v1563 = vpop.permute.xlu0 %1562
        %1566 = vset.pattern.permute.xlu0 0
        %1567 = vperm.xlu0 %1566, %v1525
        %v1568 = vpop.permute.xlu0 %1567
        %1571 = vset.pattern.permute.xlu0 0
        %1572 = vperm.xlu0 %1571, %v1526
        %v1573 = vpop.permute.xlu0 %1572
        %1576 = vset.pattern.permute.xlu0 0
        %1577 = vperm.xlu0 %1576, %v1527
        %v1578 = vpop.permute.xlu0 %1577
        %1581 = vset.pattern.permute.xlu0 0
        %1582 = vperm.xlu0 %1581, %v1528
        %v1583 = vpop.permute.xlu0 %1582
        %1586 = vset.pattern.permute.xlu0 0
        %1587 = vperm.xlu0 %1586, %v1529
        %v1588 = vpop.permute.xlu0 %1587
        %1591 = vset.pattern.permute.xlu0 0
        %1592 = vperm.xlu0 %1591, %v1530
        %v1593 = vpop.permute.xlu0 %1592
        %1596 = vset.pattern.permute.xlu0 0
        %1597 = vperm.xlu0 %1596, %v1531
        %v1598 = vpop.permute.xlu0 %1597
        %1601 = vset.pattern.permute.xlu0 0
        %1602 = vperm.xlu0 %1601, %v1532
        %v1603 = vpop.permute.xlu0 %1602
        %1606 = vset.pattern.permute.xlu0 0
        %1607 = vperm.xlu0 %1606, %v1533
        %v1608 = vpop.permute.xlu0 %1607
        %1611 = vset.pattern.permute.xlu0 0
        %1612 = vperm.xlu0 %1611, %v1534
        %v1613 = vpop.permute.xlu0 %1612
        %1616 = vset.pattern.permute.xlu0 0
        %1617 = vperm.xlu0 %1616, %v1535
        %v1618 = vpop.permute.xlu0 %1617
        %1621 = vset.pattern.permute.xlu0 0
        %1622 = vperm.xlu0 %1621, %v1536
        %v1623 = vpop.permute.xlu0 %1622
        %1626 = vset.pattern.permute.xlu0 0
        %1627 = vperm.xlu0 %1626, %v1537
        %v1628 = vpop.permute.xlu0 %1627
        %1631 = vset.pattern.permute.xlu0 0
        %1632 = vperm.xlu0 %1631, %v1538
        %v1633 = vpop.permute.xlu0 %1632
        %v1635 = vmul.f32 %v1539, %v1558
        %v1636 = vmul.f32 %v1540, %v1563
        %v1637 = vmul.f32 %v1541, %v1568
        %v1638 = vmul.f32 %v1542, %v1573
        %v1639 = vmul.f32 %v1543, %v1578
        %v1640 = vmul.f32 %v1544, %v1583
        %v1641 = vmul.f32 %v1545, %v1588
        %v1642 = vmul.f32 %v1546, %v1593
        %v1643 = vmul.f32 %v1547, %v1598
        %v1644 = vmul.f32 %v1548, %v1603
        %v1645 = vmul.f32 %v1549, %v1608
        %v1646 = vmul.f32 %v1550, %v1613
        %v1647 = vmul.f32 %v1551, %v1618
        %v1648 = vmul.f32 %v1552, %v1623
        %v1649 = vmul.f32 %v1553, %v1628
        %v1650 = vmul.f32 %v1554, %v1633
        %1651 = vst.msk [vmem:[%s301] sm:$0xff] %vm426, %v1635
        %1652 = vst.msk [vmem:[%s301 + $0x8] sm:$0xff] %vm426, %v1636
        %1653 = vst.msk [vmem:[%s301 + $0x10] sm:$0xff] %vm426, %v1637
        %1654 = vst.msk [vmem:[%s301 + $0x18] sm:$0xff] %vm426, %v1638
        %1655 = vst.msk [vmem:[%s301 + $0x20] sm:$0xff] %vm426, %v1639
        %1656 = vst.msk [vmem:[%s301 + $0x28] sm:$0xff] %vm426, %v1640
        %1657 = vst.msk [vmem:[%s301 + $0x30] sm:$0xff] %vm426, %v1641
        %1658 = vst.msk [vmem:[%s301 + $0x38] sm:$0xff] %vm426, %v1642
        %1659 = vst.msk [vmem:[%s301 + $0x40] sm:$0xff] %vm426, %v1643
        %1660 = vst.msk [vmem:[%s301 + $0x48] sm:$0xff] %vm426, %v1644
        %1661 = vst.msk [vmem:[%s301 + $0x50] sm:$0xff] %vm426, %v1645
        %1662 = vst.msk [vmem:[%s301 + $0x58] sm:$0xff] %vm426, %v1646
        %1663 = vst.msk [vmem:[%s301 + $0x60] sm:$0xff] %vm426, %v1647
        %1664 = vst.msk [vmem:[%s301 + $0x68] sm:$0xff] %vm426, %v1648
        %1665 = vst.msk [vmem:[%s301 + $0x70] sm:$0xff] %vm426, %v1649
        %1666 = vst.msk [vmem:[%s301 + $0x78] sm:$0xff] %vm426, %v1650
      $region48: #{tpu_custom_call.1} parent=39 // pred_fallthru
        _
      %s1667 = smul.u32 16, %s20
      %p1668 = scmp.lt.s32.totalorder %s1667, 31
      %s1669 = scalar_select %p1668, %s1667, 31
      %s1670 = smul.addr %s1669, 8
      %s1671 = scalar_lea.vmem %s5, %s1670
      // Predicated region
      $region49: #{tpu_custom_call.1} parent=39 // pred_check
        %p1672 = pneg %p171
      $region50: #{tpu_custom_call.1} parent=39 // pred_check_branch
        %1674 = sbr.rel (%p1672) target = $region52
      $region51: #{tpu_custom_call.1} parent=39 // pred_region
        %s1675 = smul.u32 16, %s20
      $region52: #{tpu_custom_call.1} parent=39 // pred_fallthru
        _
    $region40: #{tpu_custom_call.1} parent=5 // pred_fallthru
      _
    %p1676 = scmp.le.s32.totalorder 2, %s11
    // Predicated region
    $region53: #{tpu_custom_call.1} parent=5 // pred_check
      %p1677 = pneg %p1676
    $region54: #{tpu_custom_call.1} parent=5 // pred_check_branch
      %1679 = sbr.rel (%p1677) target = $region56
    $region55: #{tpu_custom_call.1} parent=5 // pred_region
      %s1680 = ssub.s32 %s11, 2
      // Predicated region
      $region57: #{tpu_custom_call.1} parent=55 // pred_check
        %p1681 = pneg %p177
      $region58: #{tpu_custom_call.1} parent=55 // pred_check_branch
        %1683 = sbr.rel (%p1681) target = $region60
      $region59: #{tpu_custom_call.1} parent=55 // pred_region
        %s1684 = smul.u32 16, %s22
        %p1685 = scmp.lt.s32.totalorder %s1684, 31
        %s1686 = scalar_select %p1685, %s1684, 31
        %s1687 = smul.addr %s1686, 8
        %s1688 = scalar_lea.vmem %s5, %s1687
      $region60: #{tpu_custom_call.1} parent=55 // pred_fallthru
        _
    $region56: #{tpu_custom_call.1} parent=5 // pred_fallthru
      _
  $region6: #{tpu_custom_call.1} parent=0 // loop_footer
    %s15 = sadd.s32 1, %s11
  $region7: #{tpu_custom_call.1} parent=0 // loop_footer_branch
    %10 = sbr.rel target = $region3
  $region8: #{tpu_custom_call.1} parent=0 // loop_exit
    _

</llo_original>
